<compile_context>
chip_gen: v6e
topology: v6e:2x2x1
jax: 0.10.0
libtpu: 0.0.40
codegen_flags: <defaults>
</compile_context>

<pallas_src>
import jax
import jax.numpy as jnp
from jax.experimental import pallas as pl
from jax.experimental.pallas import tpu as pltpu

EDGE_DIM = 8
OUTPUT_DIM = 32
INPUT_DIM = EDGE_DIM + 1           # 9
HIDDEN_DIM = OUTPUT_DIM * 2        # 64


def mlp_edge_kernel(attr_ref, len_ref,
                    w1a_ref, w1b_ref, b1_ref,
                    w2_ref, b2_ref,
                    w3_ref, b3_ref,
                    o_ref):
    # attr_ref: [tile_e, 8], len_ref: [tile_e, 1]
    attr = attr_ref[...]
    length = len_ref[...]

    # Fused "concat": cat([attr, length]) @ W1  ==  attr @ W1[:8] + length * W1[8:]
    h1 = jnp.dot(attr, w1a_ref[...], preferred_element_type=jnp.float32)
    h1 = h1 + length * w1b_ref[...] + b1_ref[...]      # rank-1 FMA on the VPU
    h1 = jnp.maximum(h1, 0.0)

    h2 = jnp.dot(h1, w2_ref[...], preferred_element_type=jnp.float32) + b2_ref[...]
    h2 = jnp.maximum(h2, 0.0)

    out = jnp.dot(h2, w3_ref[...], preferred_element_type=jnp.float32) + b3_ref[...]
    o_ref[...] = out.astype(o_ref.dtype)


def mlp_edge_encoder(edge_attr, edge_length, params, *, tile_e=512):
    """edge_attr: [E, 8], edge_length: [E, 1] -> [E, 32]."""
    assert tile_e % 256 == 0, "tile_e should be MXU-row aligned (multiple of 256)"

    edge_attr = edge_attr.astype(jnp.float32)
    edge_length = edge_length.astype(jnp.float32)
    E = edge_attr.shape[0]
    assert edge_attr.shape[1] == EDGE_DIM and edge_length.shape[1] == 1

    w1, b1, w2, b2, w3, b3 = params
    # Split W1 so the concat can be fused into the first layer.
    w1a = w1[:EDGE_DIM, :]          # [8, 64]
    w1b = w1[EDGE_DIM:, :]          # [1, 64]

    # Pad E up to a tile multiple (padded rows are junk-but-harmless per-row work).
    n_tiles = pl.cdiv(E, tile_e)
    e_pad = n_tiles * tile_e
    if e_pad != E:
        pad = e_pad - E
        edge_attr = jnp.pad(edge_attr, ((0, pad), (0, 0)))
        edge_length = jnp.pad(edge_length, ((0, pad), (0, 0)))

    grid = (n_tiles,)
    full = lambda shape: pl.BlockSpec(shape, lambda i: (0, 0))   # weights: constant block,
                                                                 # stays resident in VMEM

    out = pl.pallas_call(
        mlp_edge_kernel,
        out_shape=jax.ShapeDtypeStruct((e_pad, OUTPUT_DIM), jnp.float32),
        grid_spec=pltpu.PrefetchScalarGridSpec(
            num_scalar_prefetch=0,
            grid=grid,
            in_specs=[
                pl.BlockSpec((tile_e, EDGE_DIM), lambda i: (i, 0)),   # edge_attr tile
                pl.BlockSpec((tile_e, 1), lambda i: (i, 0)),          # edge_length tile
                full((EDGE_DIM, HIDDEN_DIM)),                         # w1a
                full((1, HIDDEN_DIM)),                                # w1b
                full((1, HIDDEN_DIM)),                                # b1
                full((HIDDEN_DIM, HIDDEN_DIM)),                       # w2
                full((1, HIDDEN_DIM)),                                # b2
                full((HIDDEN_DIM, OUTPUT_DIM)),                       # w3
                full((1, OUTPUT_DIM)),                                # b3
            ],
            out_specs=pl.BlockSpec((tile_e, OUTPUT_DIM), lambda i: (i, 0)),
        ),
        compiler_params=pltpu.CompilerParams(
            dimension_semantics=("parallel",)),   # grid>=2 shards across v7x TCs
    )(edge_attr, edge_length, w1a, w1b, b1, w2, b2, w3, b3)

    return out[:E]


def init_params(key):
    """Deterministic synthetic init mimicking nn.Linear shapes (stored as [in, out])."""
    k1, k2, k3, k4, k5, k6 = jax.random.split(key, 6)

    def lin(kw, kb, fan_in, fan_out):
        bound = 1.0 / jnp.sqrt(fan_in)
        w = jax.random.uniform(kw, (fan_in, fan_out), jnp.float32, -bound, bound)
        b = jax.random.uniform(kb, (1, fan_out), jnp.float32, -bound, bound)
        return w, b

    w1, b1 = lin(k1, k2, INPUT_DIM, HIDDEN_DIM)
    w2, b2 = lin(k3, k4, HIDDEN_DIM, HIDDEN_DIM)
    w3, b3 = lin(k5, k6, HIDDEN_DIM, OUTPUT_DIM)
    return (w1, b1, w2, b2, w3, b3)


def reference(edge_attr, edge_length, params):
    w1, b1, w2, b2, w3, b3 = params
    x = jnp.concatenate([edge_attr, edge_length], axis=-1)
    h = jnp.maximum(x @ w1 + b1, 0.0)
    h = jnp.maximum(h @ w2 + b2, 0.0)
    return h @ w3 + b3


if __name__ == "__main__":
    key = jax.random.PRNGKey(0)
    kp, ka, kl = jax.random.split(key, 3)

    E = 1000  # deliberately NOT tile-aligned to exercise the cdiv+padding path
    edge_attr = jax.random.normal(ka, (E, EDGE_DIM), jnp.float32)
    edge_length = jax.random.normal(kl, (E, 1), jnp.float32)

    params = init_params(kp)

    out = mlp_edge_encoder(edge_attr, edge_length, params, tile_e=512)  # grid = 2
    out = jax.block_until_ready(out)

    ref = reference(edge_attr, edge_length, params)
    assert out.shape == (E, OUTPUT_DIM)
    assert jnp.allclose(out, ref, atol=1e-5, rtol=1e-5), "mismatch vs JAX reference"

    print("KERNEL_OK")
</pallas_src>

<mosaic_0001>
module attributes {stable_mosaic.version = 11 : i64} {
  func.func @mlp_edge_kernel(%arg0: i32, %arg1: memref<512x8xf32, #tpu.memory_space<vmem>>, %arg2: memref<512x1xf32, #tpu.memory_space<vmem>>, %arg3: memref<8x64xf32, #tpu.memory_space<vmem>>, %arg4: memref<1x64xf32, #tpu.memory_space<vmem>>, %arg5: memref<1x64xf32, #tpu.memory_space<vmem>>, %arg6: memref<64x64xf32, #tpu.memory_space<vmem>>, %arg7: memref<1x64xf32, #tpu.memory_space<vmem>>, %arg8: memref<64x32xf32, #tpu.memory_space<vmem>>, %arg9: memref<1x32xf32, #tpu.memory_space<vmem>>, %arg10: memref<512x32xf32, #tpu.memory_space<vmem>>) attributes {dimension_semantics = [#tpu.dimension_semantics<parallel>], iteration_bounds = array<i64: 2>, scalar_prefetch = 0 : i64, scratch_operands = 0 : i64, tpu.core_type = #tpu.core_type<tc>, window_params = [{transform_indices = @transform_0, window_bounds = array<i64: 512, 8>}, {transform_indices = @transform_1, window_bounds = array<i64: 512, 1>}, {pipeline_mode = #tpu.pipeline_mode<synchronous>, transform_indices = @transform_2, window_bounds = array<i64: 8, 64>}, {pipeline_mode = #tpu.pipeline_mode<synchronous>, transform_indices = @transform_3, window_bounds = array<i64: 1, 64>}, {pipeline_mode = #tpu.pipeline_mode<synchronous>, transform_indices = @transform_4, window_bounds = array<i64: 1, 64>}, {pipeline_mode = #tpu.pipeline_mode<synchronous>, transform_indices = @transform_5, window_bounds = array<i64: 64, 64>}, {pipeline_mode = #tpu.pipeline_mode<synchronous>, transform_indices = @transform_6, window_bounds = array<i64: 1, 64>}, {pipeline_mode = #tpu.pipeline_mode<synchronous>, transform_indices = @transform_7, window_bounds = array<i64: 64, 32>}, {pipeline_mode = #tpu.pipeline_mode<synchronous>, transform_indices = @transform_8, window_bounds = array<i64: 1, 32>}, {transform_indices = @transform_9, window_bounds = array<i64: 512, 32>}]} {
    %c0 = arith.constant 0 : index
    %c0_0 = arith.constant 0 : index
    %0 = vector.load %arg1[%c0, %c0_0] : memref<512x8xf32, #tpu.memory_space<vmem>>, vector<512x8xf32>
    %c0_1 = arith.constant 0 : index
    %c0_2 = arith.constant 0 : index
    %1 = vector.load %arg2[%c0_1, %c0_2] : memref<512x1xf32, #tpu.memory_space<vmem>>, vector<512x1xf32>
    %c0_3 = arith.constant 0 : index
    %c0_4 = arith.constant 0 : index
    %2 = vector.load %arg3[%c0_3, %c0_4] : memref<8x64xf32, #tpu.memory_space<vmem>>, vector<8x64xf32>
    %cst = arith.constant dense<0.000000e+00> : vector<512x64xf32>
    %3 = tpu.matmul %0, %2, %cst {dimension_numbers = #tpu.dot_dimension_numbers<[1], [0], [0], [1], [0, 0, 1, 1], [], []>} : vector<512x8xf32>, vector<8x64xf32>, vector<512x64xf32> -> vector<512x64xf32>
    %c0_5 = arith.constant 0 : index
    %c0_6 = arith.constant 0 : index
    %4 = vector.load %arg4[%c0_5, %c0_6] : memref<1x64xf32, #tpu.memory_space<vmem>>, vector<1x64xf32>
    %5 = vector.broadcast %1 : vector<512x1xf32> to vector<512x64xf32>
    %6 = vector.broadcast %4 : vector<1x64xf32> to vector<512x64xf32>
    %7 = arith.mulf %5, %6 : vector<512x64xf32>
    %8 = arith.addf %3, %7 : vector<512x64xf32>
    %c0_7 = arith.constant 0 : index
    %c0_8 = arith.constant 0 : index
    %9 = vector.load %arg5[%c0_7, %c0_8] : memref<1x64xf32, #tpu.memory_space<vmem>>, vector<1x64xf32>
    %10 = vector.broadcast %9 : vector<1x64xf32> to vector<512x64xf32>
    %11 = arith.addf %8, %10 : vector<512x64xf32>
    %cst_9 = arith.constant 0.000000e+00 : f32
    %12 = vector.broadcast %cst_9 : f32 to vector<512x64xf32>
    %13 = arith.maximumf %11, %12 : vector<512x64xf32>
    %c0_10 = arith.constant 0 : index
    %c0_11 = arith.constant 0 : index
    %14 = vector.load %arg6[%c0_10, %c0_11] : memref<64x64xf32, #tpu.memory_space<vmem>>, vector<64x64xf32>
    %cst_12 = arith.constant dense<0.000000e+00> : vector<512x64xf32>
    %15 = tpu.matmul %13, %14, %cst_12 {dimension_numbers = #tpu.dot_dimension_numbers<[1], [0], [0], [1], [0, 0, 1, 1], [], []>} : vector<512x64xf32>, vector<64x64xf32>, vector<512x64xf32> -> vector<512x64xf32>
    %c0_13 = arith.constant 0 : index
    %c0_14 = arith.constant 0 : index
    %16 = vector.load %arg7[%c0_13, %c0_14] : memref<1x64xf32, #tpu.memory_space<vmem>>, vector<1x64xf32>
    %17 = vector.broadcast %16 : vector<1x64xf32> to vector<512x64xf32>
    %18 = arith.addf %15, %17 : vector<512x64xf32>
    %cst_15 = arith.constant 0.000000e+00 : f32
    %19 = vector.broadcast %cst_15 : f32 to vector<512x64xf32>
    %20 = arith.maximumf %18, %19 : vector<512x64xf32>
    %c0_16 = arith.constant 0 : index
    %c0_17 = arith.constant 0 : index
    %21 = vector.load %arg8[%c0_16, %c0_17] : memref<64x32xf32, #tpu.memory_space<vmem>>, vector<64x32xf32>
    %cst_18 = arith.constant dense<0.000000e+00> : vector<512x32xf32>
    %22 = tpu.matmul %20, %21, %cst_18 {dimension_numbers = #tpu.dot_dimension_numbers<[1], [0], [0], [1], [0, 0, 1, 1], [], []>} : vector<512x64xf32>, vector<64x32xf32>, vector<512x32xf32> -> vector<512x32xf32>
    %c0_19 = arith.constant 0 : index
    %c0_20 = arith.constant 0 : index
    %23 = vector.load %arg9[%c0_19, %c0_20] : memref<1x32xf32, #tpu.memory_space<vmem>>, vector<1x32xf32>
    %24 = vector.broadcast %23 : vector<1x32xf32> to vector<512x32xf32>
    %25 = arith.addf %22, %24 : vector<512x32xf32>
    %c0_21 = arith.constant 0 : index
    %c0_22 = arith.constant 0 : index
    %26 = vector.load %arg10[%c0_21, %c0_22] : memref<512x32xf32, #tpu.memory_space<vmem>>, vector<512x32xf32>
    tpu.vector_store %arg10[%c0_21, %c0_22], %25 {strides = array<i32>} : memref<512x32xf32, #tpu.memory_space<vmem>>, vector<512x32xf32>,
    return
  }
  func.func @transform_0(%arg0: i32) -> (i32, i32) {
    %c0_i32 = arith.constant 0 : i32
    %c0_i32_0 = arith.constant 0 : i32
    return %arg0, %c0_i32 : i32, i32
  }
  func.func @transform_1(%arg0: i32) -> (i32, i32) {
    %c0_i32 = arith.constant 0 : i32
    %c0_i32_0 = arith.constant 0 : i32
    return %arg0, %c0_i32 : i32, i32
  }
  func.func @transform_2(%arg0: i32) -> (i32, i32) {
    %c0_i32 = arith.constant 0 : i32
    %c0_i32_0 = arith.constant 0 : i32
    %c0_i32_1 = arith.constant 0 : i32
    return %c0_i32, %c0_i32_0 : i32, i32
  }
  func.func @transform_3(%arg0: i32) -> (i32, i32) {
    %c0_i32 = arith.constant 0 : i32
    %c0_i32_0 = arith.constant 0 : i32
    %c0_i32_1 = arith.constant 0 : i32
    return %c0_i32, %c0_i32_0 : i32, i32
  }
  func.func @transform_4(%arg0: i32) -> (i32, i32) {
    %c0_i32 = arith.constant 0 : i32
    %c0_i32_0 = arith.constant 0 : i32
    %c0_i32_1 = arith.constant 0 : i32
    return %c0_i32, %c0_i32_0 : i32, i32
  }
  func.func @transform_5(%arg0: i32) -> (i32, i32) {
    %c0_i32 = arith.constant 0 : i32
    %c0_i32_0 = arith.constant 0 : i32
    %c0_i32_1 = arith.constant 0 : i32
    return %c0_i32, %c0_i32_0 : i32, i32
  }
  func.func @transform_6(%arg0: i32) -> (i32, i32) {
    %c0_i32 = arith.constant 0 : i32
    %c0_i32_0 = arith.constant 0 : i32
    %c0_i32_1 = arith.constant 0 : i32
    return %c0_i32, %c0_i32_0 : i32, i32
  }
  func.func @transform_7(%arg0: i32) -> (i32, i32) {
    %c0_i32 = arith.constant 0 : i32
    %c0_i32_0 = arith.constant 0 : i32
    %c0_i32_1 = arith.constant 0 : i32
    return %c0_i32, %c0_i32_0 : i32, i32
  }
  func.func @transform_8(%arg0: i32) -> (i32, i32) {
    %c0_i32 = arith.constant 0 : i32
    %c0_i32_0 = arith.constant 0 : i32
    %c0_i32_1 = arith.constant 0 : i32
    return %c0_i32, %c0_i32_0 : i32, i32
  }
  func.func @transform_9(%arg0: i32) -> (i32, i32) {
    %c0_i32 = arith.constant 0 : i32
    %c0_i32_0 = arith.constant 0 : i32
    return %arg0, %c0_i32 : i32, i32
  }
}

</mosaic_0001>

<llo_original>
// kernel: tpu_custom_call.1
$region0: #{tpu_custom_call.1}
  #allocation0 [shape = 'u32[]', space=smem, size = 0x4, offset = 0x4, fixed_abs, tag = 'smem constant byte address 0x4 - core index']
  #allocation1 [shape = 'u32[144,128]{1,0:T(1,128)}', space=vmem, size = 0x12000, scoped, tag = 'internal scratch']
  %s0 = inlined_call_operand.vmem [shape: f32[1024,8], index: 0, kind: input, shape index: {}]
  %s1 = inlined_call_operand.vmem [shape: f32[1024,1], index: 1, kind: input, shape index: {}]
  %s2 = inlined_call_operand.vmem [shape: f32[8,64], index: 2, kind: input, shape index: {}]
  %s3 = inlined_call_operand.vmem [shape: f32[1,64], index: 3, kind: input, shape index: {}]
  %s4 = inlined_call_operand.vmem [shape: f32[1,64], index: 4, kind: input, shape index: {}]
  %s5 = inlined_call_operand.vmem [shape: f32[64,64], index: 5, kind: input, shape index: {}]
  %s6 = inlined_call_operand.vmem [shape: f32[1,64], index: 6, kind: input, shape index: {}]
  %s7 = inlined_call_operand.vmem [shape: f32[64,32], index: 7, kind: input, shape index: {}]
  %s8 = inlined_call_operand.vmem [shape: f32[1,32], index: 8, kind: input, shape index: {}]
  %s9 = inlined_call_operand.vmem [shape: f32[1024,32], index: 9, kind: output, shape index: {}]
  %s10 = sld [smem:[#allocation0]]
  $region69: #{tpu_custom_call.1} parent=0
    _
  %s12 = ssub.s32 1, %s10
  %s13 = scalar_select 0, %s12, %s10
  loop: start=0, step=1, limit=4
  $region2: #{tpu_custom_call.1} parent=0 // loop_pre_header
    _
  $region3: #{tpu_custom_call.1} parent=0 // loop_header
    %s15 = sphi 0, %s19
    %p16 = scmp.ge.s32.totalorder %s15, 4
    %s25 = sphi 0, %s27
    %s28 = sphi 0, %s25
    %s29 = sphi 0, %s28
    %s45 = sphi 0, %s29
    %s51 = sphi 0, %s53
    %s54 = sphi 0, %s51
    %s55 = sphi 0, %s54
    %s71 = sphi 0, %s55
    %s75 = sphi 0, %s75
    %s77 = sphi 0, %s75
    %s78 = sphi 0, %s77
    %s92 = sphi 0, %s78
    %s96 = sphi 0, %s96
    %s98 = sphi 0, %s96
    %s99 = sphi 0, %s98
    %s113 = sphi 0, %s99
    %s117 = sphi 0, %s117
    %s119 = sphi 0, %s117
    %s120 = sphi 0, %s119
    %s134 = sphi 0, %s120
    %s138 = sphi 0, %s138
    %s140 = sphi 0, %s138
    %s141 = sphi 0, %s140
    %s155 = sphi 0, %s141
    %s159 = sphi 0, %s159
    %s161 = sphi 0, %s159
    %s162 = sphi 0, %s161
    %s176 = sphi 0, %s162
    %s180 = sphi 0, %s180
    %s182 = sphi 0, %s180
    %s183 = sphi 0, %s182
    %s197 = sphi 0, %s183
    %s201 = sphi 0, %s201
    %s203 = sphi 0, %s201
    %s204 = sphi 0, %s203
    %s218 = sphi 0, %s204
    %s224 = sphi 0, %s226
    %s227 = sphi 0, %s224
    %s228 = sphi 0, %s227
    %s244 = sphi 0, %s228
  $region4: #{tpu_custom_call.1} parent=0 // loop_header_branch
    %18 = sbr.rel (%p16) target = $region8
  $region5: #{tpu_custom_call.1} parent=0 // loop_body
    %s20 = ssub.s32 %s15, 1
    %s21 = ssub.s32 %s15, 2
    %s22 = sadd.s32 %s15, 1
    %s23 = ssub.s32 %s15, %s22
    %p24 = scmp.eq.s32.totalorder %s23, 0
    %s26 = sadd.s32 %s25, 1
    %s27 = scalar_select %p24, %s25, %s26
    %p30 = pneg %p24
    %p31 = scmp.eq.s32.totalorder %s15, 1
    %p32 = por %p30, %p31
    %p33 = scmp.ne.s32.totalorder %s25, %s28
    %p34 = scmp.eq.s32.totalorder %s15, 0
    %p35 = por %p33, %p34
    %p36 = scmp.ne.s32.totalorder %s25, %s28
    %p37 = scmp.eq.s32.totalorder %s20, 1
    %p38 = por %p36, %p37
    %p39 = scmp.ne.s32.totalorder %s28, %s29
    %p40 = scmp.eq.s32.totalorder %s20, 0
    %p41 = por %p39, %p40
    %p42 = scmp.ne.s32.totalorder %s28, %s29
    %p43 = scmp.eq.s32.totalorder %s21, 1
    %p44 = por %p42, %p43
    %p46 = scmp.ne.s32.totalorder %s29, %s45
    %p47 = scmp.eq.s32.totalorder %s21, 0
    %p48 = por %p46, %p47
    %s49 = ssub.s32 %s15, %s22
    %p50 = scmp.eq.s32.totalorder %s49, 0
    %s52 = sadd.s32 %s51, 1
    %s53 = scalar_select %p50, %s51, %s52
    %p56 = pneg %p50
    %p57 = scmp.eq.s32.totalorder %s15, 1
    %p58 = por %p56, %p57
    %p59 = scmp.ne.s32.totalorder %s51, %s54
    %p60 = scmp.eq.s32.totalorder %s15, 0
    %p61 = por %p59, %p60
    %p62 = scmp.ne.s32.totalorder %s51, %s54
    %p63 = scmp.eq.s32.totalorder %s20, 1
    %p64 = por %p62, %p63
    %p65 = scmp.ne.s32.totalorder %s54, %s55
    %p66 = scmp.eq.s32.totalorder %s20, 0
    %p67 = por %p65, %p66
    %p68 = scmp.ne.s32.totalorder %s54, %s55
    %p69 = scmp.eq.s32.totalorder %s21, 1
    %p70 = por %p68, %p69
    %p72 = scmp.ne.s32.totalorder %s55, %s71
    %p73 = scmp.eq.s32.totalorder %s21, 0
    %p74 = por %p72, %p73
    %s76 = sadd.s32 %s75, 1
    %p79 = scmp.eq.s32.totalorder %s15, 1
    %p80 = scmp.ne.s32.totalorder %s75, %s77
    %p81 = scmp.eq.s32.totalorder %s15, 0
    %p82 = por %p80, %p81
    %p83 = scmp.ne.s32.totalorder %s75, %s77
    %p84 = scmp.eq.s32.totalorder %s20, 1
    %p85 = por %p83, %p84
    %p86 = scmp.ne.s32.totalorder %s77, %s78
    %p87 = scmp.eq.s32.totalorder %s20, 0
    %p88 = por %p86, %p87
    %p89 = scmp.ne.s32.totalorder %s77, %s78
    %p90 = scmp.eq.s32.totalorder %s21, 1
    %p91 = por %p89, %p90
    %p93 = scmp.ne.s32.totalorder %s78, %s92
    %p94 = scmp.eq.s32.totalorder %s21, 0
    %p95 = por %p93, %p94
    %s97 = sadd.s32 %s96, 1
    %p100 = scmp.eq.s32.totalorder %s15, 1
    %p101 = scmp.ne.s32.totalorder %s96, %s98
    %p102 = scmp.eq.s32.totalorder %s15, 0
    %p103 = por %p101, %p102
    %p104 = scmp.ne.s32.totalorder %s96, %s98
    %p105 = scmp.eq.s32.totalorder %s20, 1
    %p106 = por %p104, %p105
    %p107 = scmp.ne.s32.totalorder %s98, %s99
    %p108 = scmp.eq.s32.totalorder %s20, 0
    %p109 = por %p107, %p108
    %p110 = scmp.ne.s32.totalorder %s98, %s99
    %p111 = scmp.eq.s32.totalorder %s21, 1
    %p112 = por %p110, %p111
    %p114 = scmp.ne.s32.totalorder %s99, %s113
    %p115 = scmp.eq.s32.totalorder %s21, 0
    %p116 = por %p114, %p115
    %s118 = sadd.s32 %s117, 1
    %p121 = scmp.eq.s32.totalorder %s15, 1
    %p122 = scmp.ne.s32.totalorder %s117, %s119
    %p123 = scmp.eq.s32.totalorder %s15, 0
    %p124 = por %p122, %p123
    %p125 = scmp.ne.s32.totalorder %s117, %s119
    %p126 = scmp.eq.s32.totalorder %s20, 1
    %p127 = por %p125, %p126
    %p128 = scmp.ne.s32.totalorder %s119, %s120
    %p129 = scmp.eq.s32.totalorder %s20, 0
    %p130 = por %p128, %p129
    %p131 = scmp.ne.s32.totalorder %s119, %s120
    %p132 = scmp.eq.s32.totalorder %s21, 1
    %p133 = por %p131, %p132
    %p135 = scmp.ne.s32.totalorder %s120, %s134
    %p136 = scmp.eq.s32.totalorder %s21, 0
    %p137 = por %p135, %p136
    %s139 = sadd.s32 %s138, 1
    %p142 = scmp.eq.s32.totalorder %s15, 1
    %p143 = scmp.ne.s32.totalorder %s138, %s140
    %p144 = scmp.eq.s32.totalorder %s15, 0
    %p145 = por %p143, %p144
    %p146 = scmp.ne.s32.totalorder %s138, %s140
    %p147 = scmp.eq.s32.totalorder %s20, 1
    %p148 = por %p146, %p147
    %p149 = scmp.ne.s32.totalorder %s140, %s141
    %p150 = scmp.eq.s32.totalorder %s20, 0
    %p151 = por %p149, %p150
    %p152 = scmp.ne.s32.totalorder %s140, %s141
    %p153 = scmp.eq.s32.totalorder %s21, 1
    %p154 = por %p152, %p153
    %p156 = scmp.ne.s32.totalorder %s141, %s155
    %p157 = scmp.eq.s32.totalorder %s21, 0
    %p158 = por %p156, %p157
    %s160 = sadd.s32 %s159, 1
    %p163 = scmp.eq.s32.totalorder %s15, 1
    %p164 = scmp.ne.s32.totalorder %s159, %s161
    %p165 = scmp.eq.s32.totalorder %s15, 0
    %p166 = por %p164, %p165
    %p167 = scmp.ne.s32.totalorder %s159, %s161
    %p168 = scmp.eq.s32.totalorder %s20, 1
    %p169 = por %p167, %p168
    %p170 = scmp.ne.s32.totalorder %s161, %s162
    %p171 = scmp.eq.s32.totalorder %s20, 0
    %p172 = por %p170, %p171
    %p173 = scmp.ne.s32.totalorder %s161, %s162
    %p174 = scmp.eq.s32.totalorder %s21, 1
    %p175 = por %p173, %p174
    %p177 = scmp.ne.s32.totalorder %s162, %s176
    %p178 = scmp.eq.s32.totalorder %s21, 0
    %p179 = por %p177, %p178
    %s181 = sadd.s32 %s180, 1
    %p184 = scmp.eq.s32.totalorder %s15, 1
    %p185 = scmp.ne.s32.totalorder %s180, %s182
    %p186 = scmp.eq.s32.totalorder %s15, 0
    %p187 = por %p185, %p186
    %p188 = scmp.ne.s32.totalorder %s180, %s182
    %p189 = scmp.eq.s32.totalorder %s20, 1
    %p190 = por %p188, %p189
    %p191 = scmp.ne.s32.totalorder %s182, %s183
    %p192 = scmp.eq.s32.totalorder %s20, 0
    %p193 = por %p191, %p192
    %p194 = scmp.ne.s32.totalorder %s182, %s183
    %p195 = scmp.eq.s32.totalorder %s21, 1
    %p196 = por %p194, %p195
    %p198 = scmp.ne.s32.totalorder %s183, %s197
    %p199 = scmp.eq.s32.totalorder %s21, 0
    %p200 = por %p198, %p199
    %s202 = sadd.s32 %s201, 1
    %p205 = scmp.eq.s32.totalorder %s15, 1
    %p206 = scmp.ne.s32.totalorder %s201, %s203
    %p207 = scmp.eq.s32.totalorder %s15, 0
    %p208 = por %p206, %p207
    %p209 = scmp.ne.s32.totalorder %s201, %s203
    %p210 = scmp.eq.s32.totalorder %s20, 1
    %p211 = por %p209, %p210
    %p212 = scmp.ne.s32.totalorder %s203, %s204
    %p213 = scmp.eq.s32.totalorder %s20, 0
    %p214 = por %p212, %p213
    %p215 = scmp.ne.s32.totalorder %s203, %s204
    %p216 = scmp.eq.s32.totalorder %s21, 1
    %p217 = por %p215, %p216
    %p219 = scmp.ne.s32.totalorder %s204, %s218
    %p220 = scmp.eq.s32.totalorder %s21, 0
    %p221 = por %p219, %p220
    %s222 = ssub.s32 %s15, %s22
    %p223 = scmp.eq.s32.totalorder %s222, 0
    %s225 = sadd.s32 %s224, 1
    %s226 = scalar_select %p223, %s224, %s225
    %p229 = pneg %p223
    %p230 = scmp.eq.s32.totalorder %s15, 1
    %p231 = por %p229, %p230
    %p232 = scmp.ne.s32.totalorder %s224, %s227
    %p233 = scmp.eq.s32.totalorder %s15, 0
    %p234 = por %p232, %p233
    %p235 = scmp.ne.s32.totalorder %s224, %s227
    %p236 = scmp.eq.s32.totalorder %s20, 1
    %p237 = por %p235, %p236
    %p238 = scmp.ne.s32.totalorder %s227, %s228
    %p239 = scmp.eq.s32.totalorder %s20, 0
    %p240 = por %p238, %p239
    %p241 = scmp.ne.s32.totalorder %s227, %s228
    %p242 = scmp.eq.s32.totalorder %s21, 1
    %p243 = por %p241, %p242
    %p245 = scmp.ne.s32.totalorder %s228, %s244
    %p246 = scmp.eq.s32.totalorder %s21, 0
    %p247 = por %p245, %p246
    %p248 = scmp.le.s32.totalorder 1, %s15
    %p249 = scmp.lt.s32.totalorder %s15, 3
    %p250 = pnand %p248, %p249
    %p251 = pneg %p250
    // Predicated region
    $region9: #{tpu_custom_call.1} parent=5 // pred_check
      _
    $region10: #{tpu_custom_call.1} parent=5 // pred_check_branch
      %253 = sbr.rel (%p250) target = $region12
    $region11: #{tpu_custom_call.1} parent=5 // pred_region
      %s254 = ssub.s32 %s15, 1
      // Predicated region
      $region13: #{tpu_custom_call.1} parent=11 // pred_check
        %p255 = pneg %p88
      $region14: #{tpu_custom_call.1} parent=11 // pred_check_branch
        %257 = sbr.rel (%p255) target = $region16
      $region15: #{tpu_custom_call.1} parent=11 // pred_region
        _
      $region16: #{tpu_custom_call.1} parent=11 // pred_fallthru
        _
      // Predicated region
      $region17: #{tpu_custom_call.1} parent=11 // pred_check
        %p258 = pneg %p109
      $region18: #{tpu_custom_call.1} parent=11 // pred_check_branch
        %260 = sbr.rel (%p258) target = $region20
      $region19: #{tpu_custom_call.1} parent=11 // pred_region
        _
      $region20: #{tpu_custom_call.1} parent=11 // pred_fallthru
        _
      // Predicated region
      $region21: #{tpu_custom_call.1} parent=11 // pred_check
        %p261 = pneg %p130
      $region22: #{tpu_custom_call.1} parent=11 // pred_check_branch
        %263 = sbr.rel (%p261) target = $region24
      $region23: #{tpu_custom_call.1} parent=11 // pred_region
        _
      $region24: #{tpu_custom_call.1} parent=11 // pred_fallthru
        _
      // Predicated region
      $region25: #{tpu_custom_call.1} parent=11 // pred_check
        %p264 = pneg %p151
      $region26: #{tpu_custom_call.1} parent=11 // pred_check_branch
        %266 = sbr.rel (%p264) target = $region28
      $region27: #{tpu_custom_call.1} parent=11 // pred_region
        _
      $region28: #{tpu_custom_call.1} parent=11 // pred_fallthru
        _
      // Predicated region
      $region29: #{tpu_custom_call.1} parent=11 // pred_check
        %p267 = pneg %p172
      $region30: #{tpu_custom_call.1} parent=11 // pred_check_branch
        %269 = sbr.rel (%p267) target = $region32
      $region31: #{tpu_custom_call.1} parent=11 // pred_region
        _
      $region32: #{tpu_custom_call.1} parent=11 // pred_fallthru
        _
      // Predicated region
      $region33: #{tpu_custom_call.1} parent=11 // pred_check
        %p270 = pneg %p193
      $region34: #{tpu_custom_call.1} parent=11 // pred_check_branch
        %272 = sbr.rel (%p270) target = $region36
      $region35: #{tpu_custom_call.1} parent=11 // pred_region
        _
      $region36: #{tpu_custom_call.1} parent=11 // pred_fallthru
        _
      // Predicated region
      $region37: #{tpu_custom_call.1} parent=11 // pred_check
        %p273 = pneg %p214
      $region38: #{tpu_custom_call.1} parent=11 // pred_check_branch
        %275 = sbr.rel (%p273) target = $region40
      $region39: #{tpu_custom_call.1} parent=11 // pred_region
        _
      $region40: #{tpu_custom_call.1} parent=11 // pred_fallthru
        _
    $region12: #{tpu_custom_call.1} parent=5 // pred_fallthru
      _
    %p276 = scmp.lt.s32.totalorder %s15, 2
    // Predicated region
    $region41: #{tpu_custom_call.1} parent=5 // pred_check
      %p277 = pneg %p276
    $region42: #{tpu_custom_call.1} parent=5 // pred_check_branch
      %279 = sbr.rel (%p277) target = $region44
    $region43: #{tpu_custom_call.1} parent=5 // pred_region
      // Predicated region
      $region45: #{tpu_custom_call.1} parent=43 // pred_check
        %p280 = pneg %p35
      $region46: #{tpu_custom_call.1} parent=43 // pred_check_branch
        %282 = sbr.rel (%p280) target = $region48
      $region47: #{tpu_custom_call.1} parent=43 // pred_region
        %s283 = smul.u32 64, %s15
        %p284 = scmp.lt.s32.totalorder %s283, 127
        %s285 = scalar_select %p284, %s283, 127
        %s286 = smul.addr %s285, 8
        %s287 = scalar_lea.vmem %s0, %s286
        %s288 = smul.u32 64, %s15
      $region48: #{tpu_custom_call.1} parent=43 // pred_fallthru
        _
      // Predicated region
      $region49: #{tpu_custom_call.1} parent=43 // pred_check
        %p289 = pneg %p61
      $region50: #{tpu_custom_call.1} parent=43 // pred_check_branch
        %291 = sbr.rel (%p289) target = $region52
      $region51: #{tpu_custom_call.1} parent=43 // pred_region
        %s292 = smul.u32 64, %s15
        %p293 = scmp.lt.s32.totalorder %s292, 127
        %s294 = scalar_select %p293, %s292, 127
        %s295 = smul.addr %s294, 8
        %s296 = scalar_lea.vmem %s1, %s295
        %s297 = smul.u32 64, %s15
      $region52: #{tpu_custom_call.1} parent=43 // pred_fallthru
        _
    $region44: #{tpu_custom_call.1} parent=5 // pred_fallthru
      _
    %p298 = scmp.le.s32.totalorder 1, %s15
    %p299 = scmp.lt.s32.totalorder %s15, 3
    %p300 = pnand %p298, %p299
    %p301 = pneg %p300
    // Predicated region
    $region53: #{tpu_custom_call.1} parent=5 // pred_check
      _
    $region54: #{tpu_custom_call.1} parent=5 // pred_check_branch
      %303 = sbr.rel (%p300) target = $region56
    $region55: #{tpu_custom_call.1} parent=5 // pred_region
      %s304 = ssub.s32 %s15, 1
      %s305 = smul.u32 64, %s20
      %p306 = scmp.lt.s32.totalorder %s305, 127
      %s307 = scalar_select %p306, %s305, 127
      %s308 = smul.addr %s307, 8
      %s309 = scalar_lea.vmem %s0, %s308
      %p310 = pneg %p41
      %p311 = pneg %p38
      %s312 = smul.u32 64, %s20
      %p313 = scmp.lt.s32.totalorder %s312, 127
      %s314 = scalar_select %p313, %s312, 127
      %s315 = smul.addr %s314, 8
      %s316 = scalar_lea.vmem %s1, %s315
      %p317 = pneg %p67
      %p318 = pneg %p64
      %p319 = pneg %p88
      %p320 = pneg %p85
      %p321 = pneg %p109
      %p322 = pneg %p106
      %p323 = pneg %p130
      %p324 = pneg %p127
      %p325 = pneg %p151
      %p326 = pneg %p148
      %p327 = pneg %p172
      %p328 = pneg %p169
      %p329 = pneg %p193
      %p330 = pneg %p190
      %p331 = pneg %p214
      %p332 = pneg %p211
      %p333 = pneg %p240
      %p334 = pneg %p237
      %s335 = smul.u32 64, %s20
      %p336 = scmp.lt.s32.totalorder %s335, 127
      %s337 = scalar_select %p336, %s335, 127
      %s338 = smul.addr %s337, 8
      %s339 = scalar_lea.vmem %s9, %s338
      %s340 = smul.u32 64, %s20
      %p341 = scmp.lt.s32.totalorder %s340, 127
      %s342 = scalar_select %p341, %s340, 127
      %s343 = smul.addr %s342, 8
      %s344 = scalar_lea.vmem %s0, %s343
      %s345 = smul.u32 64, %s20
      %s346 = smul.u32 64, %s20
      %p347 = scmp.lt.s32.totalorder %s346, 127
      %s348 = scalar_select %p347, %s346, 127
      %s349 = smul.addr %s348, 8
      %s350 = scalar_lea.vmem %s1, %s349
      %s351 = smul.u32 64, %s20
      %s352 = smul.u32 64, %s20
      %p353 = scmp.lt.s32.totalorder %s352, 127
      %s354 = scalar_select %p353, %s352, 127
      %s355 = smul.addr %s354, 8
      %s356 = scalar_lea.vmem %s9, %s355
      %s357 = smul.u32 64, %s20
      %v358 = vld [vmem:[%s344] sm:$0xff]
      %v359 = vld [vmem:[%s344 + $0x8] sm:$0xff]
      %v360 = vld [vmem:[%s344 + $0x10] sm:$0xff]
      %v361 = vld [vmem:[%s344 + $0x18] sm:$0xff]
      %v362 = vld [vmem:[%s344 + $0x20] sm:$0xff]
      %v363 = vld [vmem:[%s344 + $0x28] sm:$0xff]
      %v364 = vld [vmem:[%s344 + $0x30] sm:$0xff]
      %v365 = vld [vmem:[%s344 + $0x38] sm:$0xff]
      %v366 = vld [vmem:[%s344 + $0x40] sm:$0xff]
      %v367 = vld [vmem:[%s344 + $0x48] sm:$0xff]
      %v368 = vld [vmem:[%s344 + $0x50] sm:$0xff]
      %v369 = vld [vmem:[%s344 + $0x58] sm:$0xff]
      %v370 = vld [vmem:[%s344 + $0x60] sm:$0xff]
      %v371 = vld [vmem:[%s344 + $0x68] sm:$0xff]
      %v372 = vld [vmem:[%s344 + $0x70] sm:$0xff]
      %v373 = vld [vmem:[%s344 + $0x78] sm:$0xff]
      %v374 = vld [vmem:[%s344 + $0x80] sm:$0xff]
      %v375 = vld [vmem:[%s344 + $0x88] sm:$0xff]
      %v376 = vld [vmem:[%s344 + $0x90] sm:$0xff]
      %v377 = vld [vmem:[%s344 + $0x98] sm:$0xff]
      %v378 = vld [vmem:[%s344 + $0xa0] sm:$0xff]
      %v379 = vld [vmem:[%s344 + $0xa8] sm:$0xff]
      %v380 = vld [vmem:[%s344 + $0xb0] sm:$0xff]
      %v381 = vld [vmem:[%s344 + $0xb8] sm:$0xff]
      %v382 = vld [vmem:[%s344 + $0xc0] sm:$0xff]
      %v383 = vld [vmem:[%s344 + $0xc8] sm:$0xff]
      %v384 = vld [vmem:[%s344 + $0xd0] sm:$0xff]
      %v385 = vld [vmem:[%s344 + $0xd8] sm:$0xff]
      %v386 = vld [vmem:[%s344 + $0xe0] sm:$0xff]
      %v387 = vld [vmem:[%s344 + $0xe8] sm:$0xff]
      %v388 = vld [vmem:[%s344 + $0xf0] sm:$0xff]
      %v389 = vld [vmem:[%s344 + $0xf8] sm:$0xff]
      %v390 = vld [vmem:[%s344 + $0x100] sm:$0xff]
      %v391 = vld [vmem:[%s344 + $0x108] sm:$0xff]
      %v392 = vld [vmem:[%s344 + $0x110] sm:$0xff]
      %v393 = vld [vmem:[%s344 + $0x118] sm:$0xff]
      %v394 = vld [vmem:[%s344 + $0x120] sm:$0xff]
      %v395 = vld [vmem:[%s344 + $0x128] sm:$0xff]
      %v396 = vld [vmem:[%s344 + $0x130] sm:$0xff]
      %v397 = vld [vmem:[%s344 + $0x138] sm:$0xff]
      %v398 = vld [vmem:[%s344 + $0x140] sm:$0xff]
      %v399 = vld [vmem:[%s344 + $0x148] sm:$0xff]
      %v400 = vld [vmem:[%s344 + $0x150] sm:$0xff]
      %v401 = vld [vmem:[%s344 + $0x158] sm:$0xff]
      %v402 = vld [vmem:[%s344 + $0x160] sm:$0xff]
      %v403 = vld [vmem:[%s344 + $0x168] sm:$0xff]
      %v404 = vld [vmem:[%s344 + $0x170] sm:$0xff]
      %v405 = vld [vmem:[%s344 + $0x178] sm:$0xff]
      %v406 = vld [vmem:[%s344 + $0x180] sm:$0xff]
      %v407 = vld [vmem:[%s344 + $0x188] sm:$0xff]
      %v408 = vld [vmem:[%s344 + $0x190] sm:$0xff]
      %v409 = vld [vmem:[%s344 + $0x198] sm:$0xff]
      %v410 = vld [vmem:[%s344 + $0x1a0] sm:$0xff]
      %v411 = vld [vmem:[%s344 + $0x1a8] sm:$0xff]
      %v412 = vld [vmem:[%s344 + $0x1b0] sm:$0xff]
      %v413 = vld [vmem:[%s344 + $0x1b8] sm:$0xff]
      %v414 = vld [vmem:[%s344 + $0x1c0] sm:$0xff]
      %v415 = vld [vmem:[%s344 + $0x1c8] sm:$0xff]
      %v416 = vld [vmem:[%s344 + $0x1d0] sm:$0xff]
      %v417 = vld [vmem:[%s344 + $0x1d8] sm:$0xff]
      %v418 = vld [vmem:[%s344 + $0x1e0] sm:$0xff]
      %v419 = vld [vmem:[%s344 + $0x1e8] sm:$0xff]
      %v420 = vld [vmem:[%s344 + $0x1f0] sm:$0xff]
      %v421 = vld [vmem:[%s344 + $0x1f8] sm:$0xff]
      %v422 = vld [vmem:[%s350] sm:$0xff]
      %v423 = vld [vmem:[%s350 + $0x8] sm:$0xff]
      %v424 = vld [vmem:[%s350 + $0x10] sm:$0xff]
      %v425 = vld [vmem:[%s350 + $0x18] sm:$0xff]
      %v426 = vld [vmem:[%s350 + $0x20] sm:$0xff]
      %v427 = vld [vmem:[%s350 + $0x28] sm:$0xff]
      %v428 = vld [vmem:[%s350 + $0x30] sm:$0xff]
      %v429 = vld [vmem:[%s350 + $0x38] sm:$0xff]
      %v430 = vld [vmem:[%s350 + $0x40] sm:$0xff]
      %v431 = vld [vmem:[%s350 + $0x48] sm:$0xff]
      %v432 = vld [vmem:[%s350 + $0x50] sm:$0xff]
      %v433 = vld [vmem:[%s350 + $0x58] sm:$0xff]
      %v434 = vld [vmem:[%s350 + $0x60] sm:$0xff]
      %v435 = vld [vmem:[%s350 + $0x68] sm:$0xff]
      %v436 = vld [vmem:[%s350 + $0x70] sm:$0xff]
      %v437 = vld [vmem:[%s350 + $0x78] sm:$0xff]
      %v438 = vld [vmem:[%s350 + $0x80] sm:$0xff]
      %v439 = vld [vmem:[%s350 + $0x88] sm:$0xff]
      %v440 = vld [vmem:[%s350 + $0x90] sm:$0xff]
      %v441 = vld [vmem:[%s350 + $0x98] sm:$0xff]
      %v442 = vld [vmem:[%s350 + $0xa0] sm:$0xff]
      %v443 = vld [vmem:[%s350 + $0xa8] sm:$0xff]
      %v444 = vld [vmem:[%s350 + $0xb0] sm:$0xff]
      %v445 = vld [vmem:[%s350 + $0xb8] sm:$0xff]
      %v446 = vld [vmem:[%s350 + $0xc0] sm:$0xff]
      %v447 = vld [vmem:[%s350 + $0xc8] sm:$0xff]
      %v448 = vld [vmem:[%s350 + $0xd0] sm:$0xff]
      %v449 = vld [vmem:[%s350 + $0xd8] sm:$0xff]
      %v450 = vld [vmem:[%s350 + $0xe0] sm:$0xff]
      %v451 = vld [vmem:[%s350 + $0xe8] sm:$0xff]
      %v452 = vld [vmem:[%s350 + $0xf0] sm:$0xff]
      %v453 = vld [vmem:[%s350 + $0xf8] sm:$0xff]
      %v454 = vld [vmem:[%s350 + $0x100] sm:$0xff]
      %v455 = vld [vmem:[%s350 + $0x108] sm:$0xff]
      %v456 = vld [vmem:[%s350 + $0x110] sm:$0xff]
      %v457 = vld [vmem:[%s350 + $0x118] sm:$0xff]
      %v458 = vld [vmem:[%s350 + $0x120] sm:$0xff]
      %v459 = vld [vmem:[%s350 + $0x128] sm:$0xff]
      %v460 = vld [vmem:[%s350 + $0x130] sm:$0xff]
      %v461 = vld [vmem:[%s350 + $0x138] sm:$0xff]
      %v462 = vld [vmem:[%s350 + $0x140] sm:$0xff]
      %v463 = vld [vmem:[%s350 + $0x148] sm:$0xff]
      %v464 = vld [vmem:[%s350 + $0x150] sm:$0xff]
      %v465 = vld [vmem:[%s350 + $0x158] sm:$0xff]
      %v466 = vld [vmem:[%s350 + $0x160] sm:$0xff]
      %v467 = vld [vmem:[%s350 + $0x168] sm:$0xff]
      %v468 = vld [vmem:[%s350 + $0x170] sm:$0xff]
      %v469 = vld [vmem:[%s350 + $0x178] sm:$0xff]
      %v470 = vld [vmem:[%s350 + $0x180] sm:$0xff]
      %v471 = vld [vmem:[%s350 + $0x188] sm:$0xff]
      %v472 = vld [vmem:[%s350 + $0x190] sm:$0xff]
      %v473 = vld [vmem:[%s350 + $0x198] sm:$0xff]
      %v474 = vld [vmem:[%s350 + $0x1a0] sm:$0xff]
      %v475 = vld [vmem:[%s350 + $0x1a8] sm:$0xff]
      %v476 = vld [vmem:[%s350 + $0x1b0] sm:$0xff]
      %v477 = vld [vmem:[%s350 + $0x1b8] sm:$0xff]
      %v478 = vld [vmem:[%s350 + $0x1c0] sm:$0xff]
      %v479 = vld [vmem:[%s350 + $0x1c8] sm:$0xff]
      %v480 = vld [vmem:[%s350 + $0x1d0] sm:$0xff]
      %v481 = vld [vmem:[%s350 + $0x1d8] sm:$0xff]
      %v482 = vld [vmem:[%s350 + $0x1e0] sm:$0xff]
      %v483 = vld [vmem:[%s350 + $0x1e8] sm:$0xff]
      %v484 = vld [vmem:[%s350 + $0x1f0] sm:$0xff]
      %v485 = vld [vmem:[%s350 + $0x1f8] sm:$0xff]
      %v486 = vld [vmem:[%s2] sm:$0xff]
      %v487 = vld [vmem:[%s3] sm:$0x1]
      %489 = vset.pattern.permute.xlu0 0
      %490 = vperm.xlu0 %489, %v422
      %v491 = vpop.permute.xlu0 %490
      %494 = vset.pattern.permute.xlu0 0
      %495 = vperm.xlu0 %494, %v423
      %v496 = vpop.permute.xlu0 %495
      %499 = vset.pattern.permute.xlu0 0
      %500 = vperm.xlu0 %499, %v424
      %v501 = vpop.permute.xlu0 %500
      %504 = vset.pattern.permute.xlu0 0
      %505 = vperm.xlu0 %504, %v425
      %v506 = vpop.permute.xlu0 %505
      %509 = vset.pattern.permute.xlu0 0
      %510 = vperm.xlu0 %509, %v426
      %v511 = vpop.permute.xlu0 %510
      %514 = vset.pattern.permute.xlu0 0
      %515 = vperm.xlu0 %514, %v427
      %v516 = vpop.permute.xlu0 %515
      %519 = vset.pattern.permute.xlu0 0
      %520 = vperm.xlu0 %519, %v428
      %v521 = vpop.permute.xlu0 %520
      %524 = vset.pattern.permute.xlu0 0
      %525 = vperm.xlu0 %524, %v429
      %v526 = vpop.permute.xlu0 %525
      %529 = vset.pattern.permute.xlu0 0
      %530 = vperm.xlu0 %529, %v430
      %v531 = vpop.permute.xlu0 %530
      %534 = vset.pattern.permute.xlu0 0
      %535 = vperm.xlu0 %534, %v431
      %v536 = vpop.permute.xlu0 %535
      %539 = vset.pattern.permute.xlu0 0
      %540 = vperm.xlu0 %539, %v432
      %v541 = vpop.permute.xlu0 %540
      %544 = vset.pattern.permute.xlu0 0
      %545 = vperm.xlu0 %544, %v433
      %v546 = vpop.permute.xlu0 %545
      %549 = vset.pattern.permute.xlu0 0
      %550 = vperm.xlu0 %549, %v434
      %v551 = vpop.permute.xlu0 %550
      %554 = vset.pattern.permute.xlu0 0
      %555 = vperm.xlu0 %554, %v435
      %v556 = vpop.permute.xlu0 %555
      %559 = vset.pattern.permute.xlu0 0
      %560 = vperm.xlu0 %559, %v436
      %v561 = vpop.permute.xlu0 %560
      %564 = vset.pattern.permute.xlu0 0
      %565 = vperm.xlu0 %564, %v437
      %v566 = vpop.permute.xlu0 %565
      %569 = vset.pattern.permute.xlu0 0
      %570 = vperm.xlu0 %569, %v438
      %v571 = vpop.permute.xlu0 %570
      %574 = vset.pattern.permute.xlu0 0
      %575 = vperm.xlu0 %574, %v439
      %v576 = vpop.permute.xlu0 %575
      %579 = vset.pattern.permute.xlu0 0
      %580 = vperm.xlu0 %579, %v440
      %v581 = vpop.permute.xlu0 %580
      %584 = vset.pattern.permute.xlu0 0
      %585 = vperm.xlu0 %584, %v441
      %v586 = vpop.permute.xlu0 %585
      %589 = vset.pattern.permute.xlu0 0
      %590 = vperm.xlu0 %589, %v442
      %v591 = vpop.permute.xlu0 %590
      %594 = vset.pattern.permute.xlu0 0
      %595 = vperm.xlu0 %594, %v443
      %v596 = vpop.permute.xlu0 %595
      %599 = vset.pattern.permute.xlu0 0
      %600 = vperm.xlu0 %599, %v444
      %v601 = vpop.permute.xlu0 %600
      %604 = vset.pattern.permute.xlu0 0
      %605 = vperm.xlu0 %604, %v445
      %v606 = vpop.permute.xlu0 %605
      %609 = vset.pattern.permute.xlu0 0
      %610 = vperm.xlu0 %609, %v446
      %v611 = vpop.permute.xlu0 %610
      %614 = vset.pattern.permute.xlu0 0
      %615 = vperm.xlu0 %614, %v447
      %v616 = vpop.permute.xlu0 %615
      %619 = vset.pattern.permute.xlu0 0
      %620 = vperm.xlu0 %619, %v448
      %v621 = vpop.permute.xlu0 %620
      %624 = vset.pattern.permute.xlu0 0
      %625 = vperm.xlu0 %624, %v449
      %v626 = vpop.permute.xlu0 %625
      %629 = vset.pattern.permute.xlu0 0
      %630 = vperm.xlu0 %629, %v450
      %v631 = vpop.permute.xlu0 %630
      %634 = vset.pattern.permute.xlu0 0
      %635 = vperm.xlu0 %634, %v451
      %v636 = vpop.permute.xlu0 %635
      %639 = vset.pattern.permute.xlu0 0
      %640 = vperm.xlu0 %639, %v452
      %v641 = vpop.permute.xlu0 %640
      %644 = vset.pattern.permute.xlu0 0
      %645 = vperm.xlu0 %644, %v453
      %v646 = vpop.permute.xlu0 %645
      %649 = vset.pattern.permute.xlu0 0
      %650 = vperm.xlu0 %649, %v454
      %v651 = vpop.permute.xlu0 %650
      %654 = vset.pattern.permute.xlu0 0
      %655 = vperm.xlu0 %654, %v455
      %v656 = vpop.permute.xlu0 %655
      %659 = vset.pattern.permute.xlu0 0
      %660 = vperm.xlu0 %659, %v456
      %v661 = vpop.permute.xlu0 %660
      %664 = vset.pattern.permute.xlu0 0
      %665 = vperm.xlu0 %664, %v457
      %v666 = vpop.permute.xlu0 %665
      %669 = vset.pattern.permute.xlu0 0
      %670 = vperm.xlu0 %669, %v458
      %v671 = vpop.permute.xlu0 %670
      %674 = vset.pattern.permute.xlu0 0
      %675 = vperm.xlu0 %674, %v459
      %v676 = vpop.permute.xlu0 %675
      %679 = vset.pattern.permute.xlu0 0
      %680 = vperm.xlu0 %679, %v460
      %v681 = vpop.permute.xlu0 %680
      %684 = vset.pattern.permute.xlu0 0
      %685 = vperm.xlu0 %684, %v461
      %v686 = vpop.permute.xlu0 %685
      %689 = vset.pattern.permute.xlu0 0
      %690 = vperm.xlu0 %689, %v462
      %v691 = vpop.permute.xlu0 %690
      %694 = vset.pattern.permute.xlu0 0
      %695 = vperm.xlu0 %694, %v463
      %v696 = vpop.permute.xlu0 %695
      %699 = vset.pattern.permute.xlu0 0
      %700 = vperm.xlu0 %699, %v464
      %v701 = vpop.permute.xlu0 %700
      %704 = vset.pattern.permute.xlu0 0
      %705 = vperm.xlu0 %704, %v465
      %v706 = vpop.permute.xlu0 %705
      %709 = vset.pattern.permute.xlu0 0
      %710 = vperm.xlu0 %709, %v466
      %v711 = vpop.permute.xlu0 %710
      %714 = vset.pattern.permute.xlu0 0
      %715 = vperm.xlu0 %714, %v467
      %v716 = vpop.permute.xlu0 %715
      %719 = vset.pattern.permute.xlu0 0
      %720 = vperm.xlu0 %719, %v468
      %v721 = vpop.permute.xlu0 %720
      %724 = vset.pattern.permute.xlu0 0
      %725 = vperm.xlu0 %724, %v469
      %v726 = vpop.permute.xlu0 %725
      %729 = vset.pattern.permute.xlu0 0
      %730 = vperm.xlu0 %729, %v470
      %v731 = vpop.permute.xlu0 %730
      %734 = vset.pattern.permute.xlu0 0
      %735 = vperm.xlu0 %734, %v471
      %v736 = vpop.permute.xlu0 %735
      %739 = vset.pattern.permute.xlu0 0
      %740 = vperm.xlu0 %739, %v472
      %v741 = vpop.permute.xlu0 %740
      %744 = vset.pattern.permute.xlu0 0
      %745 = vperm.xlu0 %744, %v473
      %v746 = vpop.permute.xlu0 %745
      %749 = vset.pattern.permute.xlu0 0
      %750 = vperm.xlu0 %749, %v474
      %v751 = vpop.permute.xlu0 %750
      %754 = vset.pattern.permute.xlu0 0
      %755 = vperm.xlu0 %754, %v475
      %v756 = vpop.permute.xlu0 %755
      %759 = vset.pattern.permute.xlu0 0
      %760 = vperm.xlu0 %759, %v476
      %v761 = vpop.permute.xlu0 %760
      %764 = vset.pattern.permute.xlu0 0
      %765 = vperm.xlu0 %764, %v477
      %v766 = vpop.permute.xlu0 %765
      %769 = vset.pattern.permute.xlu0 0
      %770 = vperm.xlu0 %769, %v478
      %v771 = vpop.permute.xlu0 %770
      %774 = vset.pattern.permute.xlu0 0
      %775 = vperm.xlu0 %774, %v479
      %v776 = vpop.permute.xlu0 %775
      %779 = vset.pattern.permute.xlu0 0
      %780 = vperm.xlu0 %779, %v480
      %v781 = vpop.permute.xlu0 %780
      %784 = vset.pattern.permute.xlu0 0
      %785 = vperm.xlu0 %784, %v481
      %v786 = vpop.permute.xlu0 %785
      %789 = vset.pattern.permute.xlu0 0
      %790 = vperm.xlu0 %789, %v482
      %v791 = vpop.permute.xlu0 %790
      %794 = vset.pattern.permute.xlu0 0
      %795 = vperm.xlu0 %794, %v483
      %v796 = vpop.permute.xlu0 %795
      %799 = vset.pattern.permute.xlu0 0
      %800 = vperm.xlu0 %799, %v484
      %v801 = vpop.permute.xlu0 %800
      %804 = vset.pattern.permute.xlu0 0
      %805 = vperm.xlu0 %804, %v485
      %v806 = vpop.permute.xlu0 %805
      %v809 = vlaneseq
      %v810 = vshrl.u32 %v809, 7
      %v811 = vsub.s32 0, %v810
      %v812 = vrot.slane %v487, %v811
      %v814 = vmul.f32 %v491, %v812
      %v815 = vmul.f32 %v496, %v812
      %v816 = vmul.f32 %v501, %v812
      %v817 = vmul.f32 %v506, %v812
      %v818 = vmul.f32 %v511, %v812
      %v819 = vmul.f32 %v516, %v812
      %v820 = vmul.f32 %v521, %v812
      %v821 = vmul.f32 %v526, %v812
      %v822 = vmul.f32 %v531, %v812
      %v823 = vmul.f32 %v536, %v812
      %v824 = vmul.f32 %v541, %v812
      %v825 = vmul.f32 %v546, %v812
      %v826 = vmul.f32 %v551, %v812
      %v827 = vmul.f32 %v556, %v812
      %v828 = vmul.f32 %v561, %v812
      %v829 = vmul.f32 %v566, %v812
      %v830 = vmul.f32 %v571, %v812
      %v831 = vmul.f32 %v576, %v812
      %v832 = vmul.f32 %v581, %v812
      %v833 = vmul.f32 %v586, %v812
      %v834 = vmul.f32 %v591, %v812
      %v835 = vmul.f32 %v596, %v812
      %v836 = vmul.f32 %v601, %v812
      %v837 = vmul.f32 %v606, %v812
      %v838 = vmul.f32 %v611, %v812
      %v839 = vmul.f32 %v616, %v812
      %v840 = vmul.f32 %v621, %v812
      %v841 = vmul.f32 %v626, %v812
      %v842 = vmul.f32 %v631, %v812
      %v843 = vmul.f32 %v636, %v812
      %v844 = vmul.f32 %v641, %v812
      %v845 = vmul.f32 %v646, %v812
      %v846 = vmul.f32 %v651, %v812
      %v847 = vmul.f32 %v656, %v812
      %v848 = vmul.f32 %v661, %v812
      %v849 = vmul.f32 %v666, %v812
      %v850 = vmul.f32 %v671, %v812
      %v851 = vmul.f32 %v676, %v812
      %v852 = vmul.f32 %v681, %v812
      %v853 = vmul.f32 %v686, %v812
      %v854 = vmul.f32 %v691, %v812
      %v855 = vmul.f32 %v696, %v812
      %v856 = vmul.f32 %v701, %v812
      %v857 = vmul.f32 %v706, %v812
      %v858 = vmul.f32 %v711, %v812
      %v859 = vmul.f32 %v716, %v812
      %v860 = vmul.f32 %v721, %v812
      %v861 = vmul.f32 %v726, %v812
      %v862 = vmul.f32 %v731, %v812
      %v863 = vmul.f32 %v736, %v812
      %v864 = vmul.f32 %v741, %v812
      %v865 = vmul.f32 %v746, %v812
      %v866 = vmul.f32 %v751, %v812
      %v867 = vmul.f32 %v756, %v812
      %v868 = vmul.f32 %v761, %v812
      %v869 = vmul.f32 %v766, %v812
      %v870 = vmul.f32 %v771, %v812
      %v871 = vmul.f32 %v776, %v812
      %v872 = vmul.f32 %v781, %v812
      %v873 = vmul.f32 %v786, %v812
      %v874 = vmul.f32 %v791, %v812
      %v875 = vmul.f32 %v796, %v812
      %v876 = vmul.f32 %v801, %v812
      %v877 = vmul.f32 %v806, %v812
      %vm878 = vcmask 64512
      %v880 = vsel %vm878, %v358, 0
      %v883 = vsel %vm878, %v359, 0
      %v886 = vsel %vm878, %v360, 0
      %v889 = vsel %vm878, %v361, 0
      %v892 = vsel %vm878, %v362, 0
      %v895 = vsel %vm878, %v363, 0
      %v898 = vsel %vm878, %v364, 0
      %v901 = vsel %vm878, %v365, 0
      %v904 = vsel %vm878, %v366, 0
      %v907 = vsel %vm878, %v367, 0
      %v910 = vsel %vm878, %v368, 0
      %v913 = vsel %vm878, %v369, 0
      %v916 = vsel %vm878, %v370, 0
      %v919 = vsel %vm878, %v371, 0
      %v922 = vsel %vm878, %v372, 0
      %v925 = vsel %vm878, %v373, 0
      %v928 = vsel %vm878, %v374, 0
      %v931 = vsel %vm878, %v375, 0
      %v934 = vsel %vm878, %v376, 0
      %v937 = vsel %vm878, %v377, 0
      %v940 = vsel %vm878, %v378, 0
      %v943 = vsel %vm878, %v379, 0
      %v946 = vsel %vm878, %v380, 0
      %v949 = vsel %vm878, %v381, 0
      %v952 = vsel %vm878, %v382, 0
      %v955 = vsel %vm878, %v383, 0
      %v958 = vsel %vm878, %v384, 0
      %v961 = vsel %vm878, %v385, 0
      %v964 = vsel %vm878, %v386, 0
      %v967 = vsel %vm878, %v387, 0
      %v970 = vsel %vm878, %v388, 0
      %v973 = vsel %vm878, %v389, 0
      %v976 = vsel %vm878, %v390, 0
      %v979 = vsel %vm878, %v391, 0
      %v982 = vsel %vm878, %v392, 0
      %v985 = vsel %vm878, %v393, 0
      %v988 = vsel %vm878, %v394, 0
      %v991 = vsel %vm878, %v395, 0
      %v994 = vsel %vm878, %v396, 0
      %v997 = vsel %vm878, %v397, 0
      %v1000 = vsel %vm878, %v398, 0
      %v1003 = vsel %vm878, %v399, 0
      %v1006 = vsel %vm878, %v400, 0
      %v1009 = vsel %vm878, %v401, 0
      %v1012 = vsel %vm878, %v402, 0
      %v1015 = vsel %vm878, %v403, 0
      %v1018 = vsel %vm878, %v404, 0
      %v1021 = vsel %vm878, %v405, 0
      %v1024 = vsel %vm878, %v406, 0
      %v1027 = vsel %vm878, %v407, 0
      %v1030 = vsel %vm878, %v408, 0
      %v1033 = vsel %vm878, %v409, 0
      %v1036 = vsel %vm878, %v410, 0
      %v1039 = vsel %vm878, %v411, 0
      %v1042 = vsel %vm878, %v412, 0
      %v1045 = vsel %vm878, %v413, 0
      %v1048 = vsel %vm878, %v414, 0
      %v1051 = vsel %vm878, %v415, 0
      %v1054 = vsel %vm878, %v416, 0
      %v1057 = vsel %vm878, %v417, 0
      %v1060 = vsel %vm878, %v418, 0
      %v1063 = vsel %vm878, %v419, 0
      %v1066 = vsel %vm878, %v420, 0
      %v1069 = vsel %vm878, %v421, 0
      %1071 = vmatprep.subr.mxu0 0.0
      %1072 = vmatpush1.msra.mxu0 0.0
      %1073 = vmatprep.subr.mxu0 0.0
      %1074 = vmatpush1.msra.mxu0 0.0
      %1075 = vmatprep.subr.mxu0 0.0
      %1076 = vmatpush1.msra.mxu0 0.0
      %1077 = vmatprep.subr.mxu0 0.0
      %1078 = vmatpush1.msra.mxu0 0.0
      %1079 = vmatprep.subr.mxu0 0.0
      %1080 = vmatpush1.msra.mxu0 0.0
      %1081 = vmatprep.subr.mxu0 0.0
      %1082 = vmatpush1.msra.mxu0 0.0
      %1083 = vmatprep.subr.mxu0 0.0
      %1084 = vmatpush1.msra.mxu0 0.0
      %1085 = vmatprep.subr.mxu0 0.0
      %1086 = vmatpush1.msra.mxu0 0.0
      %1087 = vmatprep.subr.mxu0 0.0
      %1088 = vmatpush1.msra.mxu0 0.0
      %1089 = vmatprep.subr.mxu0 0.0
      %1090 = vmatpush1.msra.mxu0 0.0
      %1091 = vmatprep.subr.mxu0 0.0
      %1092 = vmatpush1.msra.mxu0 0.0
      %1093 = vmatprep.subr.mxu0 0.0
      %1094 = vmatpush1.msra.mxu0 0.0
      %1095 = vmatprep.subr.mxu0 0.0
      %1096 = vmatpush1.msra.mxu0 0.0
      %1097 = vmatprep.subr.mxu0 0.0
      %1098 = vmatpush1.msra.mxu0 0.0
      %1099 = vmatprep.subr.mxu0 0.0
      %1100 = vmatpush1.msra.mxu0 0.0
      %1101 = vmatprep.subr.mxu0 0.0
      %1102 = vmatpush1.msra.mxu0 %v486
      %1103 = vmatprep.subr.mxu0 0.0
      %1104 = vmatpush2.msra.mxu0 0.0
      %1105 = vmatprep.subr.mxu0 0.0
      %1106 = vmatpush2.msra.mxu0 0.0
      %1107 = vmatprep.subr.mxu0 0.0
      %1108 = vmatpush2.msra.mxu0 0.0
      %1109 = vmatprep.subr.mxu0 0.0
      %1110 = vmatpush2.msra.mxu0 0.0
      %1111 = vmatprep.subr.mxu0 0.0
      %1112 = vmatpush2.msra.mxu0 0.0
      %1113 = vmatprep.subr.mxu0 0.0
      %1114 = vmatpush2.msra.mxu0 0.0
      %1115 = vmatprep.subr.mxu0 0.0
      %1116 = vmatpush2.msra.mxu0 0.0
      %1117 = vmatprep.subr.mxu0 0.0
      %1118 = vmatpush2.msra.mxu0 0.0
      %1119 = vmatprep.subr.mxu0 0.0
      %1120 = vmatpush2.msra.mxu0 0.0
      %1121 = vmatprep.subr.mxu0 0.0
      %1122 = vmatpush2.msra.mxu0 0.0
      %1123 = vmatprep.subr.mxu0 0.0
      %1124 = vmatpush2.msra.mxu0 0.0
      %1125 = vmatprep.subr.mxu0 0.0
      %1126 = vmatpush2.msra.mxu0 0.0
      %1127 = vmatprep.subr.mxu0 0.0
      %1128 = vmatpush2.msra.mxu0 0.0
      %1129 = vmatprep.subr.mxu0 0.0
      %1130 = vmatpush2.msra.mxu0 0.0
      %1131 = vmatprep.subr.mxu0 0.0
      %1132 = vmatpush2.msra.mxu0 0.0
      %1133 = vmatprep.subr.mxu0 0.0
      %1134 = vmatpush2.msra.mxu0 0.0
      %1135 = vmatprep.mubr.f32.mxu0 0.0
      %1136 = vmatmul.mubr.f32.gmra.mxu0 %v880
      %v1137 = vpop.f32.mrf.mxu0
      %v1138 = vadd.f32 %v814, %v1137
      %v1139 = vpop.f32.mrf.mxu0
      %1140 = vmatprep.mubr.f32.mxu0 0.0
      %1141 = vmatmul.mubr.f32.gmra.mxu0 %v883
      %v1142 = vpop.f32.mrf.mxu0
      %v1143 = vadd.f32 %v815, %v1142
      %v1144 = vpop.f32.mrf.mxu0
      %1145 = vmatprep.mubr.f32.mxu0 0.0
      %1146 = vmatmul.mubr.f32.gmra.mxu0 %v886
      %v1147 = vpop.f32.mrf.mxu0
      %v1148 = vadd.f32 %v816, %v1147
      %v1149 = vpop.f32.mrf.mxu0
      %1150 = vmatprep.mubr.f32.mxu0 0.0
      %1151 = vmatmul.mubr.f32.gmra.mxu0 %v889
      %v1152 = vpop.f32.mrf.mxu0
      %v1153 = vadd.f32 %v817, %v1152
      %v1154 = vpop.f32.mrf.mxu0
      %1155 = vmatprep.mubr.f32.mxu0 0.0
      %1156 = vmatmul.mubr.f32.gmra.mxu0 %v892
      %v1157 = vpop.f32.mrf.mxu0
      %v1158 = vadd.f32 %v818, %v1157
      %v1159 = vpop.f32.mrf.mxu0
      %1160 = vmatprep.mubr.f32.mxu0 0.0
      %1161 = vmatmul.mubr.f32.gmra.mxu0 %v895
      %v1162 = vpop.f32.mrf.mxu0
      %v1163 = vadd.f32 %v819, %v1162
      %v1164 = vpop.f32.mrf.mxu0
      %1165 = vmatprep.mubr.f32.mxu0 0.0
      %1166 = vmatmul.mubr.f32.gmra.mxu0 %v898
      %v1167 = vpop.f32.mrf.mxu0
      %v1168 = vadd.f32 %v820, %v1167
      %v1169 = vpop.f32.mrf.mxu0
      %1170 = vmatprep.mubr.f32.mxu0 0.0
      %1171 = vmatmul.mubr.f32.gmra.mxu0 %v901
      %v1172 = vpop.f32.mrf.mxu0
      %v1173 = vadd.f32 %v821, %v1172
      %v1174 = vpop.f32.mrf.mxu0
      %1175 = vmatprep.mubr.f32.mxu0 0.0
      %1176 = vmatmul.mubr.f32.gmra.mxu0 %v904
      %v1177 = vpop.f32.mrf.mxu0
      %v1178 = vadd.f32 %v822, %v1177
      %v1179 = vpop.f32.mrf.mxu0
      %1180 = vmatprep.mubr.f32.mxu0 0.0
      %1181 = vmatmul.mubr.f32.gmra.mxu0 %v907
      %v1182 = vpop.f32.mrf.mxu0
      %v1183 = vadd.f32 %v823, %v1182
      %v1184 = vpop.f32.mrf.mxu0
      %1185 = vmatprep.mubr.f32.mxu0 0.0
      %1186 = vmatmul.mubr.f32.gmra.mxu0 %v910
      %v1187 = vpop.f32.mrf.mxu0
      %v1188 = vadd.f32 %v824, %v1187
      %v1189 = vpop.f32.mrf.mxu0
      %1190 = vmatprep.mubr.f32.mxu0 0.0
      %1191 = vmatmul.mubr.f32.gmra.mxu0 %v913
      %v1192 = vpop.f32.mrf.mxu0
      %v1193 = vadd.f32 %v825, %v1192
      %v1194 = vpop.f32.mrf.mxu0
      %1195 = vmatprep.mubr.f32.mxu0 0.0
      %1196 = vmatmul.mubr.f32.gmra.mxu0 %v916
      %v1197 = vpop.f32.mrf.mxu0
      %v1198 = vadd.f32 %v826, %v1197
      %v1199 = vpop.f32.mrf.mxu0
      %1200 = vmatprep.mubr.f32.mxu0 0.0
      %1201 = vmatmul.mubr.f32.gmra.mxu0 %v919
      %v1202 = vpop.f32.mrf.mxu0
      %v1203 = vadd.f32 %v827, %v1202
      %v1204 = vpop.f32.mrf.mxu0
      %1205 = vmatprep.mubr.f32.mxu0 0.0
      %1206 = vmatmul.mubr.f32.gmra.mxu0 %v922
      %v1207 = vpop.f32.mrf.mxu0
      %v1208 = vadd.f32 %v828, %v1207
      %v1209 = vpop.f32.mrf.mxu0
      %1210 = vmatprep.mubr.f32.mxu0 0.0
      %1211 = vmatmul.mubr.f32.gmra.mxu0 %v925
      %v1212 = vpop.f32.mrf.mxu0
      %v1213 = vadd.f32 %v829, %v1212
      %v1214 = vpop.f32.mrf.mxu0
      %1215 = vmatprep.mubr.f32.mxu0 0.0
      %1216 = vmatmul.mubr.f32.gmra.mxu0 %v928
      %v1217 = vpop.f32.mrf.mxu0
      %v1218 = vadd.f32 %v830, %v1217
      %v1219 = vpop.f32.mrf.mxu0
      %1220 = vmatprep.mubr.f32.mxu0 0.0
      %1221 = vmatmul.mubr.f32.gmra.mxu0 %v931
      %v1222 = vpop.f32.mrf.mxu0
      %v1223 = vadd.f32 %v831, %v1222
      %v1224 = vpop.f32.mrf.mxu0
      %1225 = vmatprep.mubr.f32.mxu0 0.0
      %1226 = vmatmul.mubr.f32.gmra.mxu0 %v934
      %v1227 = vpop.f32.mrf.mxu0
      %v1228 = vadd.f32 %v832, %v1227
      %v1229 = vpop.f32.mrf.mxu0
      %1230 = vmatprep.mubr.f32.mxu0 0.0
      %1231 = vmatmul.mubr.f32.gmra.mxu0 %v937
      %v1232 = vpop.f32.mrf.mxu0
      %v1233 = vadd.f32 %v833, %v1232
      %v1234 = vpop.f32.mrf.mxu0
      %1235 = vmatprep.mubr.f32.mxu0 0.0
      %1236 = vmatmul.mubr.f32.gmra.mxu0 %v940
      %v1237 = vpop.f32.mrf.mxu0
      %v1238 = vadd.f32 %v834, %v1237
      %v1239 = vpop.f32.mrf.mxu0
      %1240 = vmatprep.mubr.f32.mxu0 0.0
      %1241 = vmatmul.mubr.f32.gmra.mxu0 %v943
      %v1242 = vpop.f32.mrf.mxu0
      %v1243 = vadd.f32 %v835, %v1242
      %v1244 = vpop.f32.mrf.mxu0
      %1245 = vmatprep.mubr.f32.mxu0 0.0
      %1246 = vmatmul.mubr.f32.gmra.mxu0 %v946
      %v1247 = vpop.f32.mrf.mxu0
      %v1248 = vadd.f32 %v836, %v1247
      %v1249 = vpop.f32.mrf.mxu0
      %1250 = vmatprep.mubr.f32.mxu0 0.0
      %1251 = vmatmul.mubr.f32.gmra.mxu0 %v949
      %v1252 = vpop.f32.mrf.mxu0
      %v1253 = vadd.f32 %v837, %v1252
      %v1254 = vpop.f32.mrf.mxu0
      %1255 = vmatprep.mubr.f32.mxu0 0.0
      %1256 = vmatmul.mubr.f32.gmra.mxu0 %v952
      %v1257 = vpop.f32.mrf.mxu0
      %v1258 = vadd.f32 %v838, %v1257
      %v1259 = vpop.f32.mrf.mxu0
      %1260 = vmatprep.mubr.f32.mxu0 0.0
      %1261 = vmatmul.mubr.f32.gmra.mxu0 %v955
      %v1262 = vpop.f32.mrf.mxu0
      %v1263 = vadd.f32 %v839, %v1262
      %v1264 = vpop.f32.mrf.mxu0
      %1265 = vmatprep.mubr.f32.mxu0 0.0
      %1266 = vmatmul.mubr.f32.gmra.mxu0 %v958
      %v1267 = vpop.f32.mrf.mxu0
      %v1268 = vadd.f32 %v840, %v1267
      %v1269 = vpop.f32.mrf.mxu0
      %1270 = vmatprep.mubr.f32.mxu0 0.0
      %1271 = vmatmul.mubr.f32.gmra.mxu0 %v961
      %v1272 = vpop.f32.mrf.mxu0
      %v1273 = vadd.f32 %v841, %v1272
      %v1274 = vpop.f32.mrf.mxu0
      %1275 = vmatprep.mubr.f32.mxu0 0.0
      %1276 = vmatmul.mubr.f32.gmra.mxu0 %v964
      %v1277 = vpop.f32.mrf.mxu0
      %v1278 = vadd.f32 %v842, %v1277
      %v1279 = vpop.f32.mrf.mxu0
      %1280 = vmatprep.mubr.f32.mxu0 0.0
      %1281 = vmatmul.mubr.f32.gmra.mxu0 %v967
      %v1282 = vpop.f32.mrf.mxu0
      %v1283 = vadd.f32 %v843, %v1282
      %v1284 = vpop.f32.mrf.mxu0
      %1285 = vmatprep.mubr.f32.mxu0 0.0
      %1286 = vmatmul.mubr.f32.gmra.mxu0 %v970
      %v1287 = vpop.f32.mrf.mxu0
      %v1288 = vadd.f32 %v844, %v1287
      %v1289 = vpop.f32.mrf.mxu0
      %1290 = vmatprep.mubr.f32.mxu0 0.0
      %1291 = vmatmul.mubr.f32.gmra.mxu0 %v973
      %v1292 = vpop.f32.mrf.mxu0
      %v1293 = vadd.f32 %v845, %v1292
      %v1294 = vpop.f32.mrf.mxu0
      %1295 = vmatprep.mubr.f32.mxu0 0.0
      %1296 = vmatmul.mubr.f32.gmra.mxu0 %v976
      %v1297 = vpop.f32.mrf.mxu0
      %v1298 = vadd.f32 %v846, %v1297
      %v1299 = vpop.f32.mrf.mxu0
      %1300 = vmatprep.mubr.f32.mxu0 0.0
      %1301 = vmatmul.mubr.f32.gmra.mxu0 %v979
      %v1302 = vpop.f32.mrf.mxu0
      %v1303 = vadd.f32 %v847, %v1302
      %v1304 = vpop.f32.mrf.mxu0
      %1305 = vmatprep.mubr.f32.mxu0 0.0
      %1306 = vmatmul.mubr.f32.gmra.mxu0 %v982
      %v1307 = vpop.f32.mrf.mxu0
      %v1308 = vadd.f32 %v848, %v1307
      %v1309 = vpop.f32.mrf.mxu0
      %1310 = vmatprep.mubr.f32.mxu0 0.0
      %1311 = vmatmul.mubr.f32.gmra.mxu0 %v985
      %v1312 = vpop.f32.mrf.mxu0
      %v1313 = vadd.f32 %v849, %v1312
      %v1314 = vpop.f32.mrf.mxu0
      %1315 = vmatprep.mubr.f32.mxu0 0.0
      %1316 = vmatmul.mubr.f32.gmra.mxu0 %v988
      %v1317 = vpop.f32.mrf.mxu0
      %v1318 = vadd.f32 %v850, %v1317
      %v1319 = vpop.f32.mrf.mxu0
      %1320 = vmatprep.mubr.f32.mxu0 0.0
      %1321 = vmatmul.mubr.f32.gmra.mxu0 %v991
      %v1322 = vpop.f32.mrf.mxu0
      %v1323 = vadd.f32 %v851, %v1322
      %v1324 = vpop.f32.mrf.mxu0
      %1325 = vmatprep.mubr.f32.mxu0 0.0
      %1326 = vmatmul.mubr.f32.gmra.mxu0 %v994
      %v1327 = vpop.f32.mrf.mxu0
      %v1328 = vadd.f32 %v852, %v1327
      %v1329 = vpop.f32.mrf.mxu0
      %1330 = vmatprep.mubr.f32.mxu0 0.0
      %1331 = vmatmul.mubr.f32.gmra.mxu0 %v997
      %v1332 = vpop.f32.mrf.mxu0
      %v1333 = vadd.f32 %v853, %v1332
      %v1334 = vpop.f32.mrf.mxu0
      %1335 = vmatprep.mubr.f32.mxu0 0.0
      %1336 = vmatmul.mubr.f32.gmra.mxu0 %v1000
      %v1337 = vpop.f32.mrf.mxu0
      %v1338 = vadd.f32 %v854, %v1337
      %v1339 = vpop.f32.mrf.mxu0
      %1340 = vmatprep.mubr.f32.mxu0 0.0
      %1341 = vmatmul.mubr.f32.gmra.mxu0 %v1003
      %v1342 = vpop.f32.mrf.mxu0
      %v1343 = vadd.f32 %v855, %v1342
      %v1344 = vpop.f32.mrf.mxu0
      %1345 = vmatprep.mubr.f32.mxu0 0.0
      %1346 = vmatmul.mubr.f32.gmra.mxu0 %v1006
      %v1347 = vpop.f32.mrf.mxu0
      %v1348 = vadd.f32 %v856, %v1347
      %v1349 = vpop.f32.mrf.mxu0
      %1350 = vmatprep.mubr.f32.mxu0 0.0
      %1351 = vmatmul.mubr.f32.gmra.mxu0 %v1009
      %v1352 = vpop.f32.mrf.mxu0
      %v1353 = vadd.f32 %v857, %v1352
      %v1354 = vpop.f32.mrf.mxu0
      %1355 = vmatprep.mubr.f32.mxu0 0.0
      %1356 = vmatmul.mubr.f32.gmra.mxu0 %v1012
      %v1357 = vpop.f32.mrf.mxu0
      %v1358 = vadd.f32 %v858, %v1357
      %v1359 = vpop.f32.mrf.mxu0
      %1360 = vmatprep.mubr.f32.mxu0 0.0
      %1361 = vmatmul.mubr.f32.gmra.mxu0 %v1015
      %v1362 = vpop.f32.mrf.mxu0
      %v1363 = vadd.f32 %v859, %v1362
      %v1364 = vpop.f32.mrf.mxu0
      %1365 = vmatprep.mubr.f32.mxu0 0.0
      %1366 = vmatmul.mubr.f32.gmra.mxu0 %v1018
      %v1367 = vpop.f32.mrf.mxu0
      %v1368 = vadd.f32 %v860, %v1367
      %v1369 = vpop.f32.mrf.mxu0
      %1370 = vmatprep.mubr.f32.mxu0 0.0
      %1371 = vmatmul.mubr.f32.gmra.mxu0 %v1021
      %v1372 = vpop.f32.mrf.mxu0
      %v1373 = vadd.f32 %v861, %v1372
      %v1374 = vpop.f32.mrf.mxu0
      %1375 = vmatprep.mubr.f32.mxu0 0.0
      %1376 = vmatmul.mubr.f32.gmra.mxu0 %v1024
      %v1377 = vpop.f32.mrf.mxu0
      %v1378 = vadd.f32 %v862, %v1377
      %v1379 = vpop.f32.mrf.mxu0
      %1380 = vmatprep.mubr.f32.mxu0 0.0
      %1381 = vmatmul.mubr.f32.gmra.mxu0 %v1027
      %v1382 = vpop.f32.mrf.mxu0
      %v1383 = vadd.f32 %v863, %v1382
      %v1384 = vpop.f32.mrf.mxu0
      %1385 = vmatprep.mubr.f32.mxu0 0.0
      %1386 = vmatmul.mubr.f32.gmra.mxu0 %v1030
      %v1387 = vpop.f32.mrf.mxu0
      %v1388 = vadd.f32 %v864, %v1387
      %v1389 = vpop.f32.mrf.mxu0
      %1390 = vmatprep.mubr.f32.mxu0 0.0
      %1391 = vmatmul.mubr.f32.gmra.mxu0 %v1033
      %v1392 = vpop.f32.mrf.mxu0
      %v1393 = vadd.f32 %v865, %v1392
      %v1394 = vpop.f32.mrf.mxu0
      %1395 = vmatprep.mubr.f32.mxu0 0.0
      %1396 = vmatmul.mubr.f32.gmra.mxu0 %v1036
      %v1397 = vpop.f32.mrf.mxu0
      %v1398 = vadd.f32 %v866, %v1397
      %v1399 = vpop.f32.mrf.mxu0
      %1400 = vmatprep.mubr.f32.mxu0 0.0
      %1401 = vmatmul.mubr.f32.gmra.mxu0 %v1039
      %v1402 = vpop.f32.mrf.mxu0
      %v1403 = vadd.f32 %v867, %v1402
      %v1404 = vpop.f32.mrf.mxu0
      %1405 = vmatprep.mubr.f32.mxu0 0.0
      %1406 = vmatmul.mubr.f32.gmra.mxu0 %v1042
      %v1407 = vpop.f32.mrf.mxu0
      %v1408 = vadd.f32 %v868, %v1407
      %v1409 = vpop.f32.mrf.mxu0
      %1410 = vmatprep.mubr.f32.mxu0 0.0
      %1411 = vmatmul.mubr.f32.gmra.mxu0 %v1045
      %v1412 = vpop.f32.mrf.mxu0
      %v1413 = vadd.f32 %v869, %v1412
      %v1414 = vpop.f32.mrf.mxu0
      %1415 = vmatprep.mubr.f32.mxu0 0.0
      %1416 = vmatmul.mubr.f32.gmra.mxu0 %v1048
      %v1417 = vpop.f32.mrf.mxu0
      %v1418 = vadd.f32 %v870, %v1417
      %v1419 = vpop.f32.mrf.mxu0
      %1420 = vmatprep.mubr.f32.mxu0 0.0
      %1421 = vmatmul.mubr.f32.gmra.mxu0 %v1051
      %v1422 = vpop.f32.mrf.mxu0
      %v1423 = vadd.f32 %v871, %v1422
      %v1424 = vpop.f32.mrf.mxu0
      %1425 = vmatprep.mubr.f32.mxu0 0.0
      %1426 = vmatmul.mubr.f32.gmra.mxu0 %v1054
      %v1427 = vpop.f32.mrf.mxu0
      %v1428 = vadd.f32 %v872, %v1427
      %v1429 = vpop.f32.mrf.mxu0
      %1430 = vmatprep.mubr.f32.mxu0 0.0
      %1431 = vmatmul.mubr.f32.gmra.mxu0 %v1057
      %v1432 = vpop.f32.mrf.mxu0
      %v1433 = vadd.f32 %v873, %v1432
      %v1434 = vpop.f32.mrf.mxu0
      %1435 = vmatprep.mubr.f32.mxu0 0.0
      %1436 = vmatmul.mubr.f32.gmra.mxu0 %v1060
      %v1437 = vpop.f32.mrf.mxu0
      %v1438 = vadd.f32 %v874, %v1437
      %v1439 = vpop.f32.mrf.mxu0
      %1440 = vmatprep.mubr.f32.mxu0 0.0
      %1441 = vmatmul.mubr.f32.gmra.mxu0 %v1063
      %v1442 = vpop.f32.mrf.mxu0
      %v1443 = vadd.f32 %v875, %v1442
      %v1444 = vpop.f32.mrf.mxu0
      %1445 = vmatprep.mubr.f32.mxu0 0.0
      %1446 = vmatmul.mubr.f32.gmra.mxu0 %v1066
      %v1447 = vpop.f32.mrf.mxu0
      %v1448 = vadd.f32 %v876, %v1447
      %v1449 = vpop.f32.mrf.mxu0
      %1450 = vmatprep.mubr.f32.mxu0 0.0
      %1451 = vmatmul.mubr.f32.gmra.mxu0 %v1069
      %v1452 = vpop.f32.mrf.mxu0
      %v1453 = vadd.f32 %v877, %v1452
      %v1454 = vpop.f32.mrf.mxu0
      %1455 = vdwg.mxu0
      %v1456 = vld [vmem:[%s4] sm:$0x1]
      %v1458 = vlaneseq
      %v1459 = vshrl.u32 %v1458, 7
      %v1460 = vsub.s32 0, %v1459
      %v1461 = vrot.slane %v1456, %v1460
      %v1463 = vadd.f32 %v1138, %v1461
      %v1464 = vadd.f32 %v1143, %v1461
      %v1465 = vadd.f32 %v1148, %v1461
      %v1466 = vadd.f32 %v1153, %v1461
      %v1467 = vadd.f32 %v1158, %v1461
      %v1468 = vadd.f32 %v1163, %v1461
      %v1469 = vadd.f32 %v1168, %v1461
      %v1470 = vadd.f32 %v1173, %v1461
      %v1471 = vadd.f32 %v1178, %v1461
      %v1472 = vadd.f32 %v1183, %v1461
      %v1473 = vadd.f32 %v1188, %v1461
      %v1474 = vadd.f32 %v1193, %v1461
      %v1475 = vadd.f32 %v1198, %v1461
      %v1476 = vadd.f32 %v1203, %v1461
      %v1477 = vadd.f32 %v1208, %v1461
      %v1478 = vadd.f32 %v1213, %v1461
      %v1479 = vadd.f32 %v1218, %v1461
      %v1480 = vadd.f32 %v1223, %v1461
      %v1481 = vadd.f32 %v1228, %v1461
      %v1482 = vadd.f32 %v1233, %v1461
      %v1483 = vadd.f32 %v1238, %v1461
      %v1484 = vadd.f32 %v1243, %v1461
      %v1485 = vadd.f32 %v1248, %v1461
      %v1486 = vadd.f32 %v1253, %v1461
      %v1487 = vadd.f32 %v1258, %v1461
      %v1488 = vadd.f32 %v1263, %v1461
      %v1489 = vadd.f32 %v1268, %v1461
      %v1490 = vadd.f32 %v1273, %v1461
      %v1491 = vadd.f32 %v1278, %v1461
      %v1492 = vadd.f32 %v1283, %v1461
      %v1493 = vadd.f32 %v1288, %v1461
      %v1494 = vadd.f32 %v1293, %v1461
      %v1495 = vadd.f32 %v1298, %v1461
      %v1496 = vadd.f32 %v1303, %v1461
      %v1497 = vadd.f32 %v1308, %v1461
      %v1498 = vadd.f32 %v1313, %v1461
      %v1499 = vadd.f32 %v1318, %v1461
      %v1500 = vadd.f32 %v1323, %v1461
      %v1501 = vadd.f32 %v1328, %v1461
      %v1502 = vadd.f32 %v1333, %v1461
      %v1503 = vadd.f32 %v1338, %v1461
      %v1504 = vadd.f32 %v1343, %v1461
      %v1505 = vadd.f32 %v1348, %v1461
      %v1506 = vadd.f32 %v1353, %v1461
      %v1507 = vadd.f32 %v1358, %v1461
      %v1508 = vadd.f32 %v1363, %v1461
      %v1509 = vadd.f32 %v1368, %v1461
      %v1510 = vadd.f32 %v1373, %v1461
      %v1511 = vadd.f32 %v1378, %v1461
      %v1512 = vadd.f32 %v1383, %v1461
      %v1513 = vadd.f32 %v1388, %v1461
      %v1514 = vadd.f32 %v1393, %v1461
      %v1515 = vadd.f32 %v1398, %v1461
      %v1516 = vadd.f32 %v1403, %v1461
      %v1517 = vadd.f32 %v1408, %v1461
      %v1518 = vadd.f32 %v1413, %v1461
      %v1519 = vadd.f32 %v1418, %v1461
      %v1520 = vadd.f32 %v1423, %v1461
      %v1521 = vadd.f32 %v1428, %v1461
      %v1522 = vadd.f32 %v1433, %v1461
      %v1523 = vadd.f32 %v1438, %v1461
      %v1524 = vadd.f32 %v1443, %v1461
      %v1525 = vadd.f32 %v1448, %v1461
      %v1526 = vadd.f32 %v1453, %v1461
      %v1527 = vmax.f32 %v1463, 0.0
      %v1528 = vmax.f32 %v1464, 0.0
      %v1529 = vmax.f32 %v1465, 0.0
      %v1530 = vmax.f32 %v1466, 0.0
      %v1531 = vmax.f32 %v1467, 0.0
      %v1532 = vmax.f32 %v1468, 0.0
      %v1533 = vmax.f32 %v1469, 0.0
      %v1534 = vmax.f32 %v1470, 0.0
      %v1535 = vmax.f32 %v1471, 0.0
      %v1536 = vmax.f32 %v1472, 0.0
      %v1537 = vmax.f32 %v1473, 0.0
      %v1538 = vmax.f32 %v1474, 0.0
      %v1539 = vmax.f32 %v1475, 0.0
      %v1540 = vmax.f32 %v1476, 0.0
      %v1541 = vmax.f32 %v1477, 0.0
      %v1542 = vmax.f32 %v1478, 0.0
      %v1543 = vmax.f32 %v1479, 0.0
      %v1544 = vmax.f32 %v1480, 0.0
      %v1545 = vmax.f32 %v1481, 0.0
      %v1546 = vmax.f32 %v1482, 0.0
      %v1547 = vmax.f32 %v1483, 0.0
      %v1548 = vmax.f32 %v1484, 0.0
      %v1549 = vmax.f32 %v1485, 0.0
      %v1550 = vmax.f32 %v1486, 0.0
      %v1551 = vmax.f32 %v1487, 0.0
      %v1552 = vmax.f32 %v1488, 0.0
      %v1553 = vmax.f32 %v1489, 0.0
      %v1554 = vmax.f32 %v1490, 0.0
      %v1555 = vmax.f32 %v1491, 0.0
      %v1556 = vmax.f32 %v1492, 0.0
      %v1557 = vmax.f32 %v1493, 0.0
      %v1558 = vmax.f32 %v1494, 0.0
      %v1559 = vmax.f32 %v1495, 0.0
      %v1560 = vmax.f32 %v1496, 0.0
      %v1561 = vmax.f32 %v1497, 0.0
      %v1562 = vmax.f32 %v1498, 0.0
      %v1563 = vmax.f32 %v1499, 0.0
      %v1564 = vmax.f32 %v1500, 0.0
      %v1565 = vmax.f32 %v1501, 0.0
      %v1566 = vmax.f32 %v1502, 0.0
      %v1567 = vmax.f32 %v1503, 0.0
      %v1568 = vmax.f32 %v1504, 0.0
      %v1569 = vmax.f32 %v1505, 0.0
      %v1570 = vmax.f32 %v1506, 0.0
      %v1571 = vmax.f32 %v1507, 0.0
      %v1572 = vmax.f32 %v1508, 0.0
      %v1573 = vmax.f32 %v1509, 0.0
      %v1574 = vmax.f32 %v1510, 0.0
      %v1575 = vmax.f32 %v1511, 0.0
      %v1576 = vmax.f32 %v1512, 0.0
      %v1577 = vmax.f32 %v1513, 0.0
      %v1578 = vmax.f32 %v1514, 0.0
      %v1579 = vmax.f32 %v1515, 0.0
      %v1580 = vmax.f32 %v1516, 0.0
      %v1581 = vmax.f32 %v1517, 0.0
      %v1582 = vmax.f32 %v1518, 0.0
      %v1583 = vmax.f32 %v1519, 0.0
      %v1584 = vmax.f32 %v1520, 0.0
      %v1585 = vmax.f32 %v1521, 0.0
      %v1586 = vmax.f32 %v1522, 0.0
      %v1587 = vmax.f32 %v1523, 0.0
      %v1588 = vmax.f32 %v1524, 0.0
      %v1589 = vmax.f32 %v1525, 0.0
      %v1590 = vmax.f32 %v1526, 0.0
      %v1591 = vld [vmem:[%s5] sm:$0xff]
      %v1592 = vld [vmem:[%s5 + $0x8] sm:$0xff]
      %v1593 = vld [vmem:[%s5 + $0x10] sm:$0xff]
      %v1594 = vld [vmem:[%s5 + $0x18] sm:$0xff]
      %v1595 = vld [vmem:[%s5 + $0x20] sm:$0xff]
      %v1596 = vld [vmem:[%s5 + $0x28] sm:$0xff]
      %v1597 = vld [vmem:[%s5 + $0x30] sm:$0xff]
      %v1598 = vld [vmem:[%s5 + $0x38] sm:$0xff]
      %v1599 = vld [vmem:[%s6] sm:$0x1]
      %v1601 = vlaneseq
      %v1602 = vshrl.u32 %v1601, 7
      %v1603 = vsub.s32 0, %v1602
      %v1604 = vrot.slane %v1599, %v1603
      %vm1606 = vcmask 523264
      %v1608 = vsel %vm1606, %v1527, 0
      %v1611 = vsel %vm1606, %v1528, 0
      %v1614 = vsel %vm1606, %v1529, 0
      %v1617 = vsel %vm1606, %v1530, 0
      %v1620 = vsel %vm1606, %v1531, 0
      %v1623 = vsel %vm1606, %v1532, 0
      %v1626 = vsel %vm1606, %v1533, 0
      %v1629 = vsel %vm1606, %v1534, 0
      %v1632 = vsel %vm1606, %v1535, 0
      %v1635 = vsel %vm1606, %v1536, 0
      %v1638 = vsel %vm1606, %v1537, 0
      %v1641 = vsel %vm1606, %v1538, 0
      %v1644 = vsel %vm1606, %v1539, 0
      %v1647 = vsel %vm1606, %v1540, 0
      %v1650 = vsel %vm1606, %v1541, 0
      %v1653 = vsel %vm1606, %v1542, 0
      %v1656 = vsel %vm1606, %v1543, 0
      %v1659 = vsel %vm1606, %v1544, 0
      %v1662 = vsel %vm1606, %v1545, 0
      %v1665 = vsel %vm1606, %v1546, 0
      %v1668 = vsel %vm1606, %v1547, 0
      %v1671 = vsel %vm1606, %v1548, 0
      %v1674 = vsel %vm1606, %v1549, 0
      %v1677 = vsel %vm1606, %v1550, 0
      %v1680 = vsel %vm1606, %v1551, 0
      %v1683 = vsel %vm1606, %v1552, 0
      %v1686 = vsel %vm1606, %v1553, 0
      %v1689 = vsel %vm1606, %v1554, 0
      %v1692 = vsel %vm1606, %v1555, 0
      %v1695 = vsel %vm1606, %v1556, 0
      %v1698 = vsel %vm1606, %v1557, 0
      %v1701 = vsel %vm1606, %v1558, 0
      %v1704 = vsel %vm1606, %v1559, 0
      %v1707 = vsel %vm1606, %v1560, 0
      %v1710 = vsel %vm1606, %v1561, 0
      %v1713 = vsel %vm1606, %v1562, 0
      %v1716 = vsel %vm1606, %v1563, 0
      %v1719 = vsel %vm1606, %v1564, 0
      %v1722 = vsel %vm1606, %v1565, 0
      %v1725 = vsel %vm1606, %v1566, 0
      %v1728 = vsel %vm1606, %v1567, 0
      %v1731 = vsel %vm1606, %v1568, 0
      %v1734 = vsel %vm1606, %v1569, 0
      %v1737 = vsel %vm1606, %v1570, 0
      %v1740 = vsel %vm1606, %v1571, 0
      %v1743 = vsel %vm1606, %v1572, 0
      %v1746 = vsel %vm1606, %v1573, 0
      %v1749 = vsel %vm1606, %v1574, 0
      %v1752 = vsel %vm1606, %v1575, 0
      %v1755 = vsel %vm1606, %v1576, 0
      %v1758 = vsel %vm1606, %v1577, 0
      %v1761 = vsel %vm1606, %v1578, 0
      %v1764 = vsel %vm1606, %v1579, 0
      %v1767 = vsel %vm1606, %v1580, 0
      %v1770 = vsel %vm1606, %v1581, 0
      %v1773 = vsel %vm1606, %v1582, 0
      %v1776 = vsel %vm1606, %v1583, 0
      %v1779 = vsel %vm1606, %v1584, 0
      %v1782 = vsel %vm1606, %v1585, 0
      %v1785 = vsel %vm1606, %v1586, 0
      %v1788 = vsel %vm1606, %v1587, 0
      %v1791 = vsel %vm1606, %v1588, 0
      %v1794 = vsel %vm1606, %v1589, 0
      %v1797 = vsel %vm1606, %v1590, 0
      %1799 = vmatprep.subr.mxu0 0.0
      %1800 = vmatpush1.msra.mxu0 0.0
      %1801 = vmatprep.subr.mxu0 0.0
      %1802 = vmatpush1.msra.mxu0 0.0
      %1803 = vmatprep.subr.mxu0 0.0
      %1804 = vmatpush1.msra.mxu0 0.0
      %1805 = vmatprep.subr.mxu0 0.0
      %1806 = vmatpush1.msra.mxu0 0.0
      %1807 = vmatprep.subr.mxu0 0.0
      %1808 = vmatpush1.msra.mxu0 0.0
      %1809 = vmatprep.subr.mxu0 0.0
      %1810 = vmatpush1.msra.mxu0 0.0
      %1811 = vmatprep.subr.mxu0 0.0
      %1812 = vmatpush1.msra.mxu0 0.0
      %1813 = vmatprep.subr.mxu0 0.0
      %1814 = vmatpush1.msra.mxu0 0.0
      %1815 = vmatprep.subr.mxu0 0.0
      %1816 = vmatpush1.msra.mxu0 %v1598
      %1817 = vmatprep.subr.mxu0 0.0
      %1818 = vmatpush1.msra.mxu0 %v1597
      %1819 = vmatprep.subr.mxu0 0.0
      %1820 = vmatpush1.msra.mxu0 %v1596
      %1821 = vmatprep.subr.mxu0 0.0
      %1822 = vmatpush1.msra.mxu0 %v1595
      %1823 = vmatprep.subr.mxu0 0.0
      %1824 = vmatpush1.msra.mxu0 %v1594
      %1825 = vmatprep.subr.mxu0 0.0
      %1826 = vmatpush1.msra.mxu0 %v1593
      %1827 = vmatprep.subr.mxu0 0.0
      %1828 = vmatpush1.msra.mxu0 %v1592
      %1829 = vmatprep.subr.mxu0 0.0
      %1830 = vmatpush1.msra.mxu0 %v1591
      %1831 = vmatprep.subr.mxu0 0.0
      %1832 = vmatpush2.msra.mxu0 0.0
      %1833 = vmatprep.subr.mxu0 0.0
      %1834 = vmatpush2.msra.mxu0 0.0
      %1835 = vmatprep.subr.mxu0 0.0
      %1836 = vmatpush2.msra.mxu0 0.0
      %1837 = vmatprep.subr.mxu0 0.0
      %1838 = vmatpush2.msra.mxu0 0.0
      %1839 = vmatprep.subr.mxu0 0.0
      %1840 = vmatpush2.msra.mxu0 0.0
      %1841 = vmatprep.subr.mxu0 0.0
      %1842 = vmatpush2.msra.mxu0 0.0
      %1843 = vmatprep.subr.mxu0 0.0
      %1844 = vmatpush2.msra.mxu0 0.0
      %1845 = vmatprep.subr.mxu0 0.0
      %1846 = vmatpush2.msra.mxu0 0.0
      %1847 = vmatprep.subr.mxu0 0.0
      %1848 = vmatpush2.msra.mxu0 0.0
      %1849 = vmatprep.subr.mxu0 0.0
      %1850 = vmatpush2.msra.mxu0 0.0
      %1851 = vmatprep.subr.mxu0 0.0
      %1852 = vmatpush2.msra.mxu0 0.0
      %1853 = vmatprep.subr.mxu0 0.0
      %1854 = vmatpush2.msra.mxu0 0.0
      %1855 = vmatprep.subr.mxu0 0.0
      %1856 = vmatpush2.msra.mxu0 0.0
      %1857 = vmatprep.subr.mxu0 0.0
      %1858 = vmatpush2.msra.mxu0 0.0
      %1859 = vmatprep.subr.mxu0 0.0
      %1860 = vmatpush2.msra.mxu0 0.0
      %1861 = vmatprep.subr.mxu0 0.0
      %1862 = vmatpush2.msra.mxu0 0.0
      %1863 = vmatprep.mubr.f32.mxu0 0.0
      %1864 = vmatmul.mubr.f32.gmra.mxu0 %v1608
      %v1865 = vpop.f32.mrf.mxu0
      %v1866 = vadd.f32 %v1604, %v1865
      %v1867 = vpop.f32.mrf.mxu0
      %1868 = vmatprep.mubr.f32.mxu0 0.0
      %1869 = vmatmul.mubr.f32.gmra.mxu0 %v1611
      %v1870 = vpop.f32.mrf.mxu0
      %v1871 = vadd.f32 %v1604, %v1870
      %v1872 = vpop.f32.mrf.mxu0
      %1873 = vmatprep.mubr.f32.mxu0 0.0
      %1874 = vmatmul.mubr.f32.gmra.mxu0 %v1614
      %v1875 = vpop.f32.mrf.mxu0
      %v1876 = vadd.f32 %v1604, %v1875
      %v1877 = vpop.f32.mrf.mxu0
      %1878 = vmatprep.mubr.f32.mxu0 0.0
      %1879 = vmatmul.mubr.f32.gmra.mxu0 %v1617
      %v1880 = vpop.f32.mrf.mxu0
      %v1881 = vadd.f32 %v1604, %v1880
      %v1882 = vpop.f32.mrf.mxu0
      %1883 = vmatprep.mubr.f32.mxu0 0.0
      %1884 = vmatmul.mubr.f32.gmra.mxu0 %v1620
      %v1885 = vpop.f32.mrf.mxu0
      %v1886 = vadd.f32 %v1604, %v1885
      %v1887 = vpop.f32.mrf.mxu0
      %1888 = vmatprep.mubr.f32.mxu0 0.0
      %1889 = vmatmul.mubr.f32.gmra.mxu0 %v1623
      %v1890 = vpop.f32.mrf.mxu0
      %v1891 = vadd.f32 %v1604, %v1890
      %v1892 = vpop.f32.mrf.mxu0
      %1893 = vmatprep.mubr.f32.mxu0 0.0
      %1894 = vmatmul.mubr.f32.gmra.mxu0 %v1626
      %v1895 = vpop.f32.mrf.mxu0
      %v1896 = vadd.f32 %v1604, %v1895
      %v1897 = vpop.f32.mrf.mxu0
      %1898 = vmatprep.mubr.f32.mxu0 0.0
      %1899 = vmatmul.mubr.f32.gmra.mxu0 %v1629
      %v1900 = vpop.f32.mrf.mxu0
      %v1901 = vadd.f32 %v1604, %v1900
      %v1902 = vpop.f32.mrf.mxu0
      %1903 = vmatprep.mubr.f32.mxu0 0.0
      %1904 = vmatmul.mubr.f32.gmra.mxu0 %v1632
      %v1905 = vpop.f32.mrf.mxu0
      %v1906 = vadd.f32 %v1604, %v1905
      %v1907 = vpop.f32.mrf.mxu0
      %1908 = vmatprep.mubr.f32.mxu0 0.0
      %1909 = vmatmul.mubr.f32.gmra.mxu0 %v1635
      %v1910 = vpop.f32.mrf.mxu0
      %v1911 = vadd.f32 %v1604, %v1910
      %v1912 = vpop.f32.mrf.mxu0
      %1913 = vmatprep.mubr.f32.mxu0 0.0
      %1914 = vmatmul.mubr.f32.gmra.mxu0 %v1638
      %v1915 = vpop.f32.mrf.mxu0
      %v1916 = vadd.f32 %v1604, %v1915
      %v1917 = vpop.f32.mrf.mxu0
      %1918 = vmatprep.mubr.f32.mxu0 0.0
      %1919 = vmatmul.mubr.f32.gmra.mxu0 %v1641
      %v1920 = vpop.f32.mrf.mxu0
      %v1921 = vadd.f32 %v1604, %v1920
      %v1922 = vpop.f32.mrf.mxu0
      %1923 = vmatprep.mubr.f32.mxu0 0.0
      %1924 = vmatmul.mubr.f32.gmra.mxu0 %v1644
      %v1925 = vpop.f32.mrf.mxu0
      %v1926 = vadd.f32 %v1604, %v1925
      %v1927 = vpop.f32.mrf.mxu0
      %1928 = vmatprep.mubr.f32.mxu0 0.0
      %1929 = vmatmul.mubr.f32.gmra.mxu0 %v1647
      %v1930 = vpop.f32.mrf.mxu0
      %v1931 = vadd.f32 %v1604, %v1930
      %v1932 = vpop.f32.mrf.mxu0
      %1933 = vmatprep.mubr.f32.mxu0 0.0
      %1934 = vmatmul.mubr.f32.gmra.mxu0 %v1650
      %v1935 = vpop.f32.mrf.mxu0
      %v1936 = vadd.f32 %v1604, %v1935
      %v1937 = vpop.f32.mrf.mxu0
      %1938 = vmatprep.mubr.f32.mxu0 0.0
      %1939 = vmatmul.mubr.f32.gmra.mxu0 %v1653
      %v1940 = vpop.f32.mrf.mxu0
      %v1941 = vadd.f32 %v1604, %v1940
      %v1942 = vpop.f32.mrf.mxu0
      %1943 = vmatprep.mubr.f32.mxu0 0.0
      %1944 = vmatmul.mubr.f32.gmra.mxu0 %v1656
      %v1945 = vpop.f32.mrf.mxu0
      %v1946 = vadd.f32 %v1604, %v1945
      %v1947 = vpop.f32.mrf.mxu0
      %1948 = vmatprep.mubr.f32.mxu0 0.0
      %1949 = vmatmul.mubr.f32.gmra.mxu0 %v1659
      %v1950 = vpop.f32.mrf.mxu0
      %v1951 = vadd.f32 %v1604, %v1950
      %v1952 = vpop.f32.mrf.mxu0
      %1953 = vmatprep.mubr.f32.mxu0 0.0
      %1954 = vmatmul.mubr.f32.gmra.mxu0 %v1662
      %v1955 = vpop.f32.mrf.mxu0
      %v1956 = vadd.f32 %v1604, %v1955
      %v1957 = vpop.f32.mrf.mxu0
      %1958 = vmatprep.mubr.f32.mxu0 0.0
      %1959 = vmatmul.mubr.f32.gmra.mxu0 %v1665
      %v1960 = vpop.f32.mrf.mxu0
      %v1961 = vadd.f32 %v1604, %v1960
      %v1962 = vpop.f32.mrf.mxu0
      %1963 = vmatprep.mubr.f32.mxu0 0.0
      %1964 = vmatmul.mubr.f32.gmra.mxu0 %v1668
      %v1965 = vpop.f32.mrf.mxu0
      %v1966 = vadd.f32 %v1604, %v1965
      %v1967 = vpop.f32.mrf.mxu0
      %1968 = vmatprep.mubr.f32.mxu0 0.0
      %1969 = vmatmul.mubr.f32.gmra.mxu0 %v1671
      %v1970 = vpop.f32.mrf.mxu0
      %v1971 = vadd.f32 %v1604, %v1970
      %v1972 = vpop.f32.mrf.mxu0
      %1973 = vmatprep.mubr.f32.mxu0 0.0
      %1974 = vmatmul.mubr.f32.gmra.mxu0 %v1674
      %v1975 = vpop.f32.mrf.mxu0
      %v1976 = vadd.f32 %v1604, %v1975
      %v1977 = vpop.f32.mrf.mxu0
      %1978 = vmatprep.mubr.f32.mxu0 0.0
      %1979 = vmatmul.mubr.f32.gmra.mxu0 %v1677
      %v1980 = vpop.f32.mrf.mxu0
      %v1981 = vadd.f32 %v1604, %v1980
      %v1982 = vpop.f32.mrf.mxu0
      %1983 = vmatprep.mubr.f32.mxu0 0.0
      %1984 = vmatmul.mubr.f32.gmra.mxu0 %v1680
      %v1985 = vpop.f32.mrf.mxu0
      %v1986 = vadd.f32 %v1604, %v1985
      %v1987 = vpop.f32.mrf.mxu0
      %1988 = vmatprep.mubr.f32.mxu0 0.0
      %1989 = vmatmul.mubr.f32.gmra.mxu0 %v1683
      %v1990 = vpop.f32.mrf.mxu0
      %v1991 = vadd.f32 %v1604, %v1990
      %v1992 = vpop.f32.mrf.mxu0
      %1993 = vmatprep.mubr.f32.mxu0 0.0
      %1994 = vmatmul.mubr.f32.gmra.mxu0 %v1686
      %v1995 = vpop.f32.mrf.mxu0
      %v1996 = vadd.f32 %v1604, %v1995
      %v1997 = vpop.f32.mrf.mxu0
      %1998 = vmatprep.mubr.f32.mxu0 0.0
      %1999 = vmatmul.mubr.f32.gmra.mxu0 %v1689
      %v2000 = vpop.f32.mrf.mxu0
      %v2001 = vadd.f32 %v1604, %v2000
      %v2002 = vpop.f32.mrf.mxu0
      %2003 = vmatprep.mubr.f32.mxu0 0.0
      %2004 = vmatmul.mubr.f32.gmra.mxu0 %v1692
      %v2005 = vpop.f32.mrf.mxu0
      %v2006 = vadd.f32 %v1604, %v2005
      %v2007 = vpop.f32.mrf.mxu0
      %2008 = vmatprep.mubr.f32.mxu0 0.0
      %2009 = vmatmul.mubr.f32.gmra.mxu0 %v1695
      %v2010 = vpop.f32.mrf.mxu0
      %v2011 = vadd.f32 %v1604, %v2010
      %v2012 = vpop.f32.mrf.mxu0
      %2013 = vmatprep.mubr.f32.mxu0 0.0
      %2014 = vmatmul.mubr.f32.gmra.mxu0 %v1698
      %v2015 = vpop.f32.mrf.mxu0
      %v2016 = vadd.f32 %v1604, %v2015
      %v2017 = vpop.f32.mrf.mxu0
      %2018 = vmatprep.mubr.f32.mxu0 0.0
      %2019 = vmatmul.mubr.f32.gmra.mxu0 %v1701
      %v2020 = vpop.f32.mrf.mxu0
      %v2021 = vadd.f32 %v1604, %v2020
      %v2022 = vpop.f32.mrf.mxu0
      %2023 = vmatprep.mubr.f32.mxu0 0.0
      %2024 = vmatmul.mubr.f32.gmra.mxu0 %v1704
      %v2025 = vpop.f32.mrf.mxu0
      %v2026 = vadd.f32 %v1604, %v2025
      %v2027 = vpop.f32.mrf.mxu0
      %2028 = vmatprep.mubr.f32.mxu0 0.0
      %2029 = vmatmul.mubr.f32.gmra.mxu0 %v1707
      %v2030 = vpop.f32.mrf.mxu0
      %v2031 = vadd.f32 %v1604, %v2030
      %v2032 = vpop.f32.mrf.mxu0
      %2033 = vmatprep.mubr.f32.mxu0 0.0
      %2034 = vmatmul.mubr.f32.gmra.mxu0 %v1710
      %v2035 = vpop.f32.mrf.mxu0
      %v2036 = vadd.f32 %v1604, %v2035
      %v2037 = vpop.f32.mrf.mxu0
      %2038 = vmatprep.mubr.f32.mxu0 0.0
      %2039 = vmatmul.mubr.f32.gmra.mxu0 %v1713
      %v2040 = vpop.f32.mrf.mxu0
      %v2041 = vadd.f32 %v1604, %v2040
      %v2042 = vpop.f32.mrf.mxu0
      %2043 = vmatprep.mubr.f32.mxu0 0.0
      %2044 = vmatmul.mubr.f32.gmra.mxu0 %v1716
      %v2045 = vpop.f32.mrf.mxu0
      %v2046 = vadd.f32 %v1604, %v2045
      %v2047 = vpop.f32.mrf.mxu0
      %2048 = vmatprep.mubr.f32.mxu0 0.0
      %2049 = vmatmul.mubr.f32.gmra.mxu0 %v1719
      %v2050 = vpop.f32.mrf.mxu0
      %v2051 = vadd.f32 %v1604, %v2050
      %v2052 = vpop.f32.mrf.mxu0
      %2053 = vmatprep.mubr.f32.mxu0 0.0
      %2054 = vmatmul.mubr.f32.gmra.mxu0 %v1722
      %v2055 = vpop.f32.mrf.mxu0
      %v2056 = vadd.f32 %v1604, %v2055
      %v2057 = vpop.f32.mrf.mxu0
      %2058 = vmatprep.mubr.f32.mxu0 0.0
      %2059 = vmatmul.mubr.f32.gmra.mxu0 %v1725
      %v2060 = vpop.f32.mrf.mxu0
      %v2061 = vadd.f32 %v1604, %v2060
      %v2062 = vpop.f32.mrf.mxu0
      %2063 = vmatprep.mubr.f32.mxu0 0.0
      %2064 = vmatmul.mubr.f32.gmra.mxu0 %v1728
      %v2065 = vpop.f32.mrf.mxu0
      %v2066 = vadd.f32 %v1604, %v2065
      %v2067 = vpop.f32.mrf.mxu0
      %2068 = vmatprep.mubr.f32.mxu0 0.0
      %2069 = vmatmul.mubr.f32.gmra.mxu0 %v1731
      %v2070 = vpop.f32.mrf.mxu0
      %v2071 = vadd.f32 %v1604, %v2070
      %v2072 = vpop.f32.mrf.mxu0
      %2073 = vmatprep.mubr.f32.mxu0 0.0
      %2074 = vmatmul.mubr.f32.gmra.mxu0 %v1734
      %v2075 = vpop.f32.mrf.mxu0
      %v2076 = vadd.f32 %v1604, %v2075
      %v2077 = vpop.f32.mrf.mxu0
      %2078 = vmatprep.mubr.f32.mxu0 0.0
      %2079 = vmatmul.mubr.f32.gmra.mxu0 %v1737
      %v2080 = vpop.f32.mrf.mxu0
      %v2081 = vadd.f32 %v1604, %v2080
      %v2082 = vpop.f32.mrf.mxu0
      %2083 = vmatprep.mubr.f32.mxu0 0.0
      %2084 = vmatmul.mubr.f32.gmra.mxu0 %v1740
      %v2085 = vpop.f32.mrf.mxu0
      %v2086 = vadd.f32 %v1604, %v2085
      %v2087 = vpop.f32.mrf.mxu0
      %2088 = vmatprep.mubr.f32.mxu0 0.0
      %2089 = vmatmul.mubr.f32.gmra.mxu0 %v1743
      %v2090 = vpop.f32.mrf.mxu0
      %v2091 = vadd.f32 %v1604, %v2090
      %v2092 = vpop.f32.mrf.mxu0
      %2093 = vmatprep.mubr.f32.mxu0 0.0
      %2094 = vmatmul.mubr.f32.gmra.mxu0 %v1746
      %v2095 = vpop.f32.mrf.mxu0
      %v2096 = vadd.f32 %v1604, %v2095
      %v2097 = vpop.f32.mrf.mxu0
      %2098 = vmatprep.mubr.f32.mxu0 0.0
      %2099 = vmatmul.mubr.f32.gmra.mxu0 %v1749
      %v2100 = vpop.f32.mrf.mxu0
      %v2101 = vadd.f32 %v1604, %v2100
      %v2102 = vpop.f32.mrf.mxu0
      %2103 = vmatprep.mubr.f32.mxu0 0.0
      %2104 = vmatmul.mubr.f32.gmra.mxu0 %v1752
      %v2105 = vpop.f32.mrf.mxu0
      %v2106 = vadd.f32 %v1604, %v2105
      %v2107 = vpop.f32.mrf.mxu0
      %2108 = vmatprep.mubr.f32.mxu0 0.0
      %2109 = vmatmul.mubr.f32.gmra.mxu0 %v1755
      %v2110 = vpop.f32.mrf.mxu0
      %v2111 = vadd.f32 %v1604, %v2110
      %v2112 = vpop.f32.mrf.mxu0
      %2113 = vmatprep.mubr.f32.mxu0 0.0
      %2114 = vmatmul.mubr.f32.gmra.mxu0 %v1758
      %v2115 = vpop.f32.mrf.mxu0
      %v2116 = vadd.f32 %v1604, %v2115
      %v2117 = vpop.f32.mrf.mxu0
      %2118 = vmatprep.mubr.f32.mxu0 0.0
      %2119 = vmatmul.mubr.f32.gmra.mxu0 %v1761
      %v2120 = vpop.f32.mrf.mxu0
      %v2121 = vadd.f32 %v1604, %v2120
      %v2122 = vpop.f32.mrf.mxu0
      %2123 = vmatprep.mubr.f32.mxu0 0.0
      %2124 = vmatmul.mubr.f32.gmra.mxu0 %v1764
      %v2125 = vpop.f32.mrf.mxu0
      %v2126 = vadd.f32 %v1604, %v2125
      %v2127 = vpop.f32.mrf.mxu0
      %2128 = vmatprep.mubr.f32.mxu0 0.0
      %2129 = vmatmul.mubr.f32.gmra.mxu0 %v1767
      %v2130 = vpop.f32.mrf.mxu0
      %v2131 = vadd.f32 %v1604, %v2130
      %v2132 = vpop.f32.mrf.mxu0
      %2133 = vmatprep.mubr.f32.mxu0 0.0
      %2134 = vmatmul.mubr.f32.gmra.mxu0 %v1770
      %v2135 = vpop.f32.mrf.mxu0
      %v2136 = vadd.f32 %v1604, %v2135
      %v2137 = vpop.f32.mrf.mxu0
      %2138 = vmatprep.mubr.f32.mxu0 0.0
      %2139 = vmatmul.mubr.f32.gmra.mxu0 %v1773
      %v2140 = vpop.f32.mrf.mxu0
      %v2141 = vadd.f32 %v1604, %v2140
      %v2142 = vpop.f32.mrf.mxu0
      %2143 = vmatprep.mubr.f32.mxu0 0.0
      %2144 = vmatmul.mubr.f32.gmra.mxu0 %v1776
      %v2145 = vpop.f32.mrf.mxu0
      %v2146 = vadd.f32 %v1604, %v2145
      %v2147 = vpop.f32.mrf.mxu0
      %2148 = vmatprep.mubr.f32.mxu0 0.0
      %2149 = vmatmul.mubr.f32.gmra.mxu0 %v1779
      %v2150 = vpop.f32.mrf.mxu0
      %v2151 = vadd.f32 %v1604, %v2150
      %v2152 = vpop.f32.mrf.mxu0
      %2153 = vmatprep.mubr.f32.mxu0 0.0
      %2154 = vmatmul.mubr.f32.gmra.mxu0 %v1782
      %v2155 = vpop.f32.mrf.mxu0
      %v2156 = vadd.f32 %v1604, %v2155
      %v2157 = vpop.f32.mrf.mxu0
      %2158 = vmatprep.mubr.f32.mxu0 0.0
      %2159 = vmatmul.mubr.f32.gmra.mxu0 %v1785
      %v2160 = vpop.f32.mrf.mxu0
      %v2161 = vadd.f32 %v1604, %v2160
      %v2162 = vpop.f32.mrf.mxu0
      %2163 = vmatprep.mubr.f32.mxu0 0.0
      %2164 = vmatmul.mubr.f32.gmra.mxu0 %v1788
      %v2165 = vpop.f32.mrf.mxu0
      %v2166 = vadd.f32 %v1604, %v2165
      %v2167 = vpop.f32.mrf.mxu0
      %2168 = vmatprep.mubr.f32.mxu0 0.0
      %2169 = vmatmul.mubr.f32.gmra.mxu0 %v1791
      %v2170 = vpop.f32.mrf.mxu0
      %v2171 = vadd.f32 %v1604, %v2170
      %v2172 = vpop.f32.mrf.mxu0
      %2173 = vmatprep.mubr.f32.mxu0 0.0
      %2174 = vmatmul.mubr.f32.gmra.mxu0 %v1794
      %v2175 = vpop.f32.mrf.mxu0
      %v2176 = vadd.f32 %v1604, %v2175
      %v2177 = vpop.f32.mrf.mxu0
      %2178 = vmatprep.mubr.f32.mxu0 0.0
      %2179 = vmatmul.mubr.f32.gmra.mxu0 %v1797
      %v2180 = vpop.f32.mrf.mxu0
      %v2181 = vadd.f32 %v1604, %v2180
      %v2182 = vpop.f32.mrf.mxu0
      %2183 = vdwg.mxu0
      %v2184 = vmax.f32 %v1866, 0.0
      %v2185 = vmax.f32 %v1871, 0.0
      %v2186 = vmax.f32 %v1876, 0.0
      %v2187 = vmax.f32 %v1881, 0.0
      %v2188 = vmax.f32 %v1886, 0.0
      %v2189 = vmax.f32 %v1891, 0.0
      %v2190 = vmax.f32 %v1896, 0.0
      %v2191 = vmax.f32 %v1901, 0.0
      %v2192 = vmax.f32 %v1906, 0.0
      %v2193 = vmax.f32 %v1911, 0.0
      %v2194 = vmax.f32 %v1916, 0.0
      %v2195 = vmax.f32 %v1921, 0.0
      %v2196 = vmax.f32 %v1926, 0.0
      %v2197 = vmax.f32 %v1931, 0.0
      %v2198 = vmax.f32 %v1936, 0.0
      %v2199 = vmax.f32 %v1941, 0.0
      %v2200 = vmax.f32 %v1946, 0.0
      %v2201 = vmax.f32 %v1951, 0.0
      %v2202 = vmax.f32 %v1956, 0.0
      %v2203 = vmax.f32 %v1961, 0.0
      %v2204 = vmax.f32 %v1966, 0.0
      %v2205 = vmax.f32 %v1971, 0.0
      %v2206 = vmax.f32 %v1976, 0.0
      %v2207 = vmax.f32 %v1981, 0.0
      %v2208 = vmax.f32 %v1986, 0.0
      %v2209 = vmax.f32 %v1991, 0.0
      %v2210 = vmax.f32 %v1996, 0.0
      %v2211 = vmax.f32 %v2001, 0.0
      %v2212 = vmax.f32 %v2006, 0.0
      %v2213 = vmax.f32 %v2011, 0.0
      %v2214 = vmax.f32 %v2016, 0.0
      %v2215 = vmax.f32 %v2021, 0.0
      %v2216 = vmax.f32 %v2026, 0.0
      %v2217 = vmax.f32 %v2031, 0.0
      %v2218 = vmax.f32 %v2036, 0.0
      %v2219 = vmax.f32 %v2041, 0.0
      %v2220 = vmax.f32 %v2046, 0.0
      %v2221 = vmax.f32 %v2051, 0.0
      %v2222 = vmax.f32 %v2056, 0.0
      %v2223 = vmax.f32 %v2061, 0.0
      %v2224 = vmax.f32 %v2066, 0.0
      %v2225 = vmax.f32 %v2071, 0.0
      %v2226 = vmax.f32 %v2076, 0.0
      %v2227 = vmax.f32 %v2081, 0.0
      %v2228 = vmax.f32 %v2086, 0.0
      %v2229 = vmax.f32 %v2091, 0.0
      %v2230 = vmax.f32 %v2096, 0.0
      %v2231 = vmax.f32 %v2101, 0.0
      %v2232 = vmax.f32 %v2106, 0.0
      %v2233 = vmax.f32 %v2111, 0.0
      %v2234 = vmax.f32 %v2116, 0.0
      %v2235 = vmax.f32 %v2121, 0.0
      %v2236 = vmax.f32 %v2126, 0.0
      %v2237 = vmax.f32 %v2131, 0.0
      %v2238 = vmax.f32 %v2136, 0.0
      %v2239 = vmax.f32 %v2141, 0.0
      %v2240 = vmax.f32 %v2146, 0.0
      %v2241 = vmax.f32 %v2151, 0.0
      %v2242 = vmax.f32 %v2156, 0.0
      %v2243 = vmax.f32 %v2161, 0.0
      %v2244 = vmax.f32 %v2166, 0.0
      %v2245 = vmax.f32 %v2171, 0.0
      %v2246 = vmax.f32 %v2176, 0.0
      %v2247 = vmax.f32 %v2181, 0.0
      %v2248 = vld [vmem:[%s7] sm:$0xff]
      %v2249 = vld [vmem:[%s7 + $0x8] sm:$0xff]
      %v2250 = vld [vmem:[%s7 + $0x10] sm:$0xff]
      %v2251 = vld [vmem:[%s7 + $0x18] sm:$0xff]
      %v2252 = vld [vmem:[%s7 + $0x20] sm:$0xff]
      %v2253 = vld [vmem:[%s7 + $0x28] sm:$0xff]
      %v2254 = vld [vmem:[%s7 + $0x30] sm:$0xff]
      %v2255 = vld [vmem:[%s7 + $0x38] sm:$0xff]
      %v2256 = vld [vmem:[%s8] sm:$0x1]
      %v2258 = vlaneseq
      %v2259 = vshrl.u32 %v2258, 7
      %v2260 = vsub.s32 0, %v2259
      %v2261 = vrot.slane %v2256, %v2260
      %v2264 = vsel %vm1606, %v2184, 0
      %v2267 = vsel %vm1606, %v2185, 0
      %v2270 = vsel %vm1606, %v2186, 0
      %v2273 = vsel %vm1606, %v2187, 0
      %v2276 = vsel %vm1606, %v2188, 0
      %v2279 = vsel %vm1606, %v2189, 0
      %v2282 = vsel %vm1606, %v2190, 0
      %v2285 = vsel %vm1606, %v2191, 0
      %v2288 = vsel %vm1606, %v2192, 0
      %v2291 = vsel %vm1606, %v2193, 0
      %v2294 = vsel %vm1606, %v2194, 0
      %v2297 = vsel %vm1606, %v2195, 0
      %v2300 = vsel %vm1606, %v2196, 0
      %v2303 = vsel %vm1606, %v2197, 0
      %v2306 = vsel %vm1606, %v2198, 0
      %v2309 = vsel %vm1606, %v2199, 0
      %v2312 = vsel %vm1606, %v2200, 0
      %v2315 = vsel %vm1606, %v2201, 0
      %v2318 = vsel %vm1606, %v2202, 0
      %v2321 = vsel %vm1606, %v2203, 0
      %v2324 = vsel %vm1606, %v2204, 0
      %v2327 = vsel %vm1606, %v2205, 0
      %v2330 = vsel %vm1606, %v2206, 0
      %v2333 = vsel %vm1606, %v2207, 0
      %v2336 = vsel %vm1606, %v2208, 0
      %v2339 = vsel %vm1606, %v2209, 0
      %v2342 = vsel %vm1606, %v2210, 0
      %v2345 = vsel %vm1606, %v2211, 0
      %v2348 = vsel %vm1606, %v2212, 0
      %v2351 = vsel %vm1606, %v2213, 0
      %v2354 = vsel %vm1606, %v2214, 0
      %v2357 = vsel %vm1606, %v2215, 0
      %v2360 = vsel %vm1606, %v2216, 0
      %v2363 = vsel %vm1606, %v2217, 0
      %v2366 = vsel %vm1606, %v2218, 0
      %v2369 = vsel %vm1606, %v2219, 0
      %v2372 = vsel %vm1606, %v2220, 0
      %v2375 = vsel %vm1606, %v2221, 0
      %v2378 = vsel %vm1606, %v2222, 0
      %v2381 = vsel %vm1606, %v2223, 0
      %v2384 = vsel %vm1606, %v2224, 0
      %v2387 = vsel %vm1606, %v2225, 0
      %v2390 = vsel %vm1606, %v2226, 0
      %v2393 = vsel %vm1606, %v2227, 0
      %v2396 = vsel %vm1606, %v2228, 0
      %v2399 = vsel %vm1606, %v2229, 0
      %v2402 = vsel %vm1606, %v2230, 0
      %v2405 = vsel %vm1606, %v2231, 0
      %v2408 = vsel %vm1606, %v2232, 0
      %v2411 = vsel %vm1606, %v2233, 0
      %v2414 = vsel %vm1606, %v2234, 0
      %v2417 = vsel %vm1606, %v2235, 0
      %v2420 = vsel %vm1606, %v2236, 0
      %v2423 = vsel %vm1606, %v2237, 0
      %v2426 = vsel %vm1606, %v2238, 0
      %v2429 = vsel %vm1606, %v2239, 0
      %v2432 = vsel %vm1606, %v2240, 0
      %v2435 = vsel %vm1606, %v2241, 0
      %v2438 = vsel %vm1606, %v2242, 0
      %v2441 = vsel %vm1606, %v2243, 0
      %v2444 = vsel %vm1606, %v2244, 0
      %v2447 = vsel %vm1606, %v2245, 0
      %v2450 = vsel %vm1606, %v2246, 0
      %v2453 = vsel %vm1606, %v2247, 0
      %2455 = vmatprep.subr.mxu0 0.0
      %2456 = vmatpush1.msra.mxu0 0.0
      %2457 = vmatprep.subr.mxu0 0.0
      %2458 = vmatpush1.msra.mxu0 0.0
      %2459 = vmatprep.subr.mxu0 0.0
      %2460 = vmatpush1.msra.mxu0 0.0
      %2461 = vmatprep.subr.mxu0 0.0
      %2462 = vmatpush1.msra.mxu0 0.0
      %2463 = vmatprep.subr.mxu0 0.0
      %2464 = vmatpush1.msra.mxu0 0.0
      %2465 = vmatprep.subr.mxu0 0.0
      %2466 = vmatpush1.msra.mxu0 0.0
      %2467 = vmatprep.subr.mxu0 0.0
      %2468 = vmatpush1.msra.mxu0 0.0
      %2469 = vmatprep.subr.mxu0 0.0
      %2470 = vmatpush1.msra.mxu0 0.0
      %2471 = vmatprep.subr.mxu0 0.0
      %2472 = vmatpush1.msra.mxu0 %v2255
      %2473 = vmatprep.subr.mxu0 0.0
      %2474 = vmatpush1.msra.mxu0 %v2254
      %2475 = vmatprep.subr.mxu0 0.0
      %2476 = vmatpush1.msra.mxu0 %v2253
      %2477 = vmatprep.subr.mxu0 0.0
      %2478 = vmatpush1.msra.mxu0 %v2252
      %2479 = vmatprep.subr.mxu0 0.0
      %2480 = vmatpush1.msra.mxu0 %v2251
      %2481 = vmatprep.subr.mxu0 0.0
      %2482 = vmatpush1.msra.mxu0 %v2250
      %2483 = vmatprep.subr.mxu0 0.0
      %2484 = vmatpush1.msra.mxu0 %v2249
      %2485 = vmatprep.subr.mxu0 0.0
      %2486 = vmatpush1.msra.mxu0 %v2248
      %2487 = vmatprep.subr.mxu0 0.0
      %2488 = vmatpush2.msra.mxu0 0.0
      %2489 = vmatprep.subr.mxu0 0.0
      %2490 = vmatpush2.msra.mxu0 0.0
      %2491 = vmatprep.subr.mxu0 0.0
      %2492 = vmatpush2.msra.mxu0 0.0
      %2493 = vmatprep.subr.mxu0 0.0
      %2494 = vmatpush2.msra.mxu0 0.0
      %2495 = vmatprep.subr.mxu0 0.0
      %2496 = vmatpush2.msra.mxu0 0.0
      %2497 = vmatprep.subr.mxu0 0.0
      %2498 = vmatpush2.msra.mxu0 0.0
      %2499 = vmatprep.subr.mxu0 0.0
      %2500 = vmatpush2.msra.mxu0 0.0
      %2501 = vmatprep.subr.mxu0 0.0
      %2502 = vmatpush2.msra.mxu0 0.0
      %2503 = vmatprep.subr.mxu0 0.0
      %2504 = vmatpush2.msra.mxu0 0.0
      %2505 = vmatprep.subr.mxu0 0.0
      %2506 = vmatpush2.msra.mxu0 0.0
      %2507 = vmatprep.subr.mxu0 0.0
      %2508 = vmatpush2.msra.mxu0 0.0
      %2509 = vmatprep.subr.mxu0 0.0
      %2510 = vmatpush2.msra.mxu0 0.0
      %2511 = vmatprep.subr.mxu0 0.0
      %2512 = vmatpush2.msra.mxu0 0.0
      %2513 = vmatprep.subr.mxu0 0.0
      %2514 = vmatpush2.msra.mxu0 0.0
      %2515 = vmatprep.subr.mxu0 0.0
      %2516 = vmatpush2.msra.mxu0 0.0
      %2517 = vmatprep.subr.mxu0 0.0
      %2518 = vmatpush2.msra.mxu0 0.0
      %2519 = vmatprep.mubr.f32.mxu0 0.0
      %2520 = vmatmul.mubr.f32.gmra.mxu0 %v2264
      %v2521 = vpop.f32.mrf.mxu0
      %v2522 = vadd.f32 %v2261, %v2521
      %v2523 = vpop.f32.mrf.mxu0
      %2524 = vmatprep.mubr.f32.mxu0 0.0
      %2525 = vmatmul.mubr.f32.gmra.mxu0 %v2267
      %v2526 = vpop.f32.mrf.mxu0
      %v2527 = vadd.f32 %v2261, %v2526
      %v2528 = vpop.f32.mrf.mxu0
      %2529 = vmatprep.mubr.f32.mxu0 0.0
      %2530 = vmatmul.mubr.f32.gmra.mxu0 %v2270
      %v2531 = vpop.f32.mrf.mxu0
      %v2532 = vadd.f32 %v2261, %v2531
      %v2533 = vpop.f32.mrf.mxu0
      %2534 = vmatprep.mubr.f32.mxu0 0.0
      %2535 = vmatmul.mubr.f32.gmra.mxu0 %v2273
      %v2536 = vpop.f32.mrf.mxu0
      %v2537 = vadd.f32 %v2261, %v2536
      %v2538 = vpop.f32.mrf.mxu0
      %2539 = vmatprep.mubr.f32.mxu0 0.0
      %2540 = vmatmul.mubr.f32.gmra.mxu0 %v2276
      %v2541 = vpop.f32.mrf.mxu0
      %v2542 = vadd.f32 %v2261, %v2541
      %v2543 = vpop.f32.mrf.mxu0
      %2544 = vmatprep.mubr.f32.mxu0 0.0
      %2545 = vmatmul.mubr.f32.gmra.mxu0 %v2279
      %v2546 = vpop.f32.mrf.mxu0
      %v2547 = vadd.f32 %v2261, %v2546
      %v2548 = vpop.f32.mrf.mxu0
      %2549 = vmatprep.mubr.f32.mxu0 0.0
      %2550 = vmatmul.mubr.f32.gmra.mxu0 %v2282
      %v2551 = vpop.f32.mrf.mxu0
      %v2552 = vadd.f32 %v2261, %v2551
      %v2553 = vpop.f32.mrf.mxu0
      %2554 = vmatprep.mubr.f32.mxu0 0.0
      %2555 = vmatmul.mubr.f32.gmra.mxu0 %v2285
      %v2556 = vpop.f32.mrf.mxu0
      %v2557 = vadd.f32 %v2261, %v2556
      %v2558 = vpop.f32.mrf.mxu0
      %2559 = vmatprep.mubr.f32.mxu0 0.0
      %2560 = vmatmul.mubr.f32.gmra.mxu0 %v2288
      %v2561 = vpop.f32.mrf.mxu0
      %v2562 = vadd.f32 %v2261, %v2561
      %v2563 = vpop.f32.mrf.mxu0
      %2564 = vmatprep.mubr.f32.mxu0 0.0
      %2565 = vmatmul.mubr.f32.gmra.mxu0 %v2291
      %v2566 = vpop.f32.mrf.mxu0
      %v2567 = vadd.f32 %v2261, %v2566
      %v2568 = vpop.f32.mrf.mxu0
      %2569 = vmatprep.mubr.f32.mxu0 0.0
      %2570 = vmatmul.mubr.f32.gmra.mxu0 %v2294
      %v2571 = vpop.f32.mrf.mxu0
      %v2572 = vadd.f32 %v2261, %v2571
      %v2573 = vpop.f32.mrf.mxu0
      %2574 = vmatprep.mubr.f32.mxu0 0.0
      %2575 = vmatmul.mubr.f32.gmra.mxu0 %v2297
      %v2576 = vpop.f32.mrf.mxu0
      %v2577 = vadd.f32 %v2261, %v2576
      %v2578 = vpop.f32.mrf.mxu0
      %2579 = vmatprep.mubr.f32.mxu0 0.0
      %2580 = vmatmul.mubr.f32.gmra.mxu0 %v2300
      %v2581 = vpop.f32.mrf.mxu0
      %v2582 = vadd.f32 %v2261, %v2581
      %v2583 = vpop.f32.mrf.mxu0
      %2584 = vmatprep.mubr.f32.mxu0 0.0
      %2585 = vmatmul.mubr.f32.gmra.mxu0 %v2303
      %v2586 = vpop.f32.mrf.mxu0
      %v2587 = vadd.f32 %v2261, %v2586
      %v2588 = vpop.f32.mrf.mxu0
      %2589 = vmatprep.mubr.f32.mxu0 0.0
      %2590 = vmatmul.mubr.f32.gmra.mxu0 %v2306
      %v2591 = vpop.f32.mrf.mxu0
      %v2592 = vadd.f32 %v2261, %v2591
      %v2593 = vpop.f32.mrf.mxu0
      %2594 = vmatprep.mubr.f32.mxu0 0.0
      %2595 = vmatmul.mubr.f32.gmra.mxu0 %v2309
      %v2596 = vpop.f32.mrf.mxu0
      %v2597 = vadd.f32 %v2261, %v2596
      %v2598 = vpop.f32.mrf.mxu0
      %2599 = vmatprep.mubr.f32.mxu0 0.0
      %2600 = vmatmul.mubr.f32.gmra.mxu0 %v2312
      %v2601 = vpop.f32.mrf.mxu0
      %v2602 = vadd.f32 %v2261, %v2601
      %v2603 = vpop.f32.mrf.mxu0
      %2604 = vmatprep.mubr.f32.mxu0 0.0
      %2605 = vmatmul.mubr.f32.gmra.mxu0 %v2315
      %v2606 = vpop.f32.mrf.mxu0
      %v2607 = vadd.f32 %v2261, %v2606
      %v2608 = vpop.f32.mrf.mxu0
      %2609 = vmatprep.mubr.f32.mxu0 0.0
      %2610 = vmatmul.mubr.f32.gmra.mxu0 %v2318
      %v2611 = vpop.f32.mrf.mxu0
      %v2612 = vadd.f32 %v2261, %v2611
      %v2613 = vpop.f32.mrf.mxu0
      %2614 = vmatprep.mubr.f32.mxu0 0.0
      %2615 = vmatmul.mubr.f32.gmra.mxu0 %v2321
      %v2616 = vpop.f32.mrf.mxu0
      %v2617 = vadd.f32 %v2261, %v2616
      %v2618 = vpop.f32.mrf.mxu0
      %2619 = vmatprep.mubr.f32.mxu0 0.0
      %2620 = vmatmul.mubr.f32.gmra.mxu0 %v2324
      %v2621 = vpop.f32.mrf.mxu0
      %v2622 = vadd.f32 %v2261, %v2621
      %v2623 = vpop.f32.mrf.mxu0
      %2624 = vmatprep.mubr.f32.mxu0 0.0
      %2625 = vmatmul.mubr.f32.gmra.mxu0 %v2327
      %v2626 = vpop.f32.mrf.mxu0
      %v2627 = vadd.f32 %v2261, %v2626
      %v2628 = vpop.f32.mrf.mxu0
      %2629 = vmatprep.mubr.f32.mxu0 0.0
      %2630 = vmatmul.mubr.f32.gmra.mxu0 %v2330
      %v2631 = vpop.f32.mrf.mxu0
      %v2632 = vadd.f32 %v2261, %v2631
      %v2633 = vpop.f32.mrf.mxu0
      %2634 = vmatprep.mubr.f32.mxu0 0.0
      %2635 = vmatmul.mubr.f32.gmra.mxu0 %v2333
      %v2636 = vpop.f32.mrf.mxu0
      %v2637 = vadd.f32 %v2261, %v2636
      %v2638 = vpop.f32.mrf.mxu0
      %2639 = vmatprep.mubr.f32.mxu0 0.0
      %2640 = vmatmul.mubr.f32.gmra.mxu0 %v2336
      %v2641 = vpop.f32.mrf.mxu0
      %v2642 = vadd.f32 %v2261, %v2641
      %v2643 = vpop.f32.mrf.mxu0
      %2644 = vmatprep.mubr.f32.mxu0 0.0
      %2645 = vmatmul.mubr.f32.gmra.mxu0 %v2339
      %v2646 = vpop.f32.mrf.mxu0
      %v2647 = vadd.f32 %v2261, %v2646
      %v2648 = vpop.f32.mrf.mxu0
      %2649 = vmatprep.mubr.f32.mxu0 0.0
      %2650 = vmatmul.mubr.f32.gmra.mxu0 %v2342
      %v2651 = vpop.f32.mrf.mxu0
      %v2652 = vadd.f32 %v2261, %v2651
      %v2653 = vpop.f32.mrf.mxu0
      %2654 = vmatprep.mubr.f32.mxu0 0.0
      %2655 = vmatmul.mubr.f32.gmra.mxu0 %v2345
      %v2656 = vpop.f32.mrf.mxu0
      %v2657 = vadd.f32 %v2261, %v2656
      %v2658 = vpop.f32.mrf.mxu0
      %2659 = vmatprep.mubr.f32.mxu0 0.0
      %2660 = vmatmul.mubr.f32.gmra.mxu0 %v2348
      %v2661 = vpop.f32.mrf.mxu0
      %v2662 = vadd.f32 %v2261, %v2661
      %v2663 = vpop.f32.mrf.mxu0
      %2664 = vmatprep.mubr.f32.mxu0 0.0
      %2665 = vmatmul.mubr.f32.gmra.mxu0 %v2351
      %v2666 = vpop.f32.mrf.mxu0
      %v2667 = vadd.f32 %v2261, %v2666
      %v2668 = vpop.f32.mrf.mxu0
      %2669 = vmatprep.mubr.f32.mxu0 0.0
      %2670 = vmatmul.mubr.f32.gmra.mxu0 %v2354
      %v2671 = vpop.f32.mrf.mxu0
      %v2672 = vadd.f32 %v2261, %v2671
      %v2673 = vpop.f32.mrf.mxu0
      %2674 = vmatprep.mubr.f32.mxu0 0.0
      %2675 = vmatmul.mubr.f32.gmra.mxu0 %v2357
      %v2676 = vpop.f32.mrf.mxu0
      %v2677 = vadd.f32 %v2261, %v2676
      %v2678 = vpop.f32.mrf.mxu0
      %2679 = vmatprep.mubr.f32.mxu0 0.0
      %2680 = vmatmul.mubr.f32.gmra.mxu0 %v2360
      %v2681 = vpop.f32.mrf.mxu0
      %v2682 = vadd.f32 %v2261, %v2681
      %v2683 = vpop.f32.mrf.mxu0
      %2684 = vmatprep.mubr.f32.mxu0 0.0
      %2685 = vmatmul.mubr.f32.gmra.mxu0 %v2363
      %v2686 = vpop.f32.mrf.mxu0
      %v2687 = vadd.f32 %v2261, %v2686
      %v2688 = vpop.f32.mrf.mxu0
      %2689 = vmatprep.mubr.f32.mxu0 0.0
      %2690 = vmatmul.mubr.f32.gmra.mxu0 %v2366
      %v2691 = vpop.f32.mrf.mxu0
      %v2692 = vadd.f32 %v2261, %v2691
      %v2693 = vpop.f32.mrf.mxu0
      %2694 = vmatprep.mubr.f32.mxu0 0.0
      %2695 = vmatmul.mubr.f32.gmra.mxu0 %v2369
      %v2696 = vpop.f32.mrf.mxu0
      %v2697 = vadd.f32 %v2261, %v2696
      %v2698 = vpop.f32.mrf.mxu0
      %2699 = vmatprep.mubr.f32.mxu0 0.0
      %2700 = vmatmul.mubr.f32.gmra.mxu0 %v2372
      %v2701 = vpop.f32.mrf.mxu0
      %v2702 = vadd.f32 %v2261, %v2701
      %v2703 = vpop.f32.mrf.mxu0
      %2704 = vmatprep.mubr.f32.mxu0 0.0
      %2705 = vmatmul.mubr.f32.gmra.mxu0 %v2375
      %v2706 = vpop.f32.mrf.mxu0
      %v2707 = vadd.f32 %v2261, %v2706
      %v2708 = vpop.f32.mrf.mxu0
      %2709 = vmatprep.mubr.f32.mxu0 0.0
      %2710 = vmatmul.mubr.f32.gmra.mxu0 %v2378
      %v2711 = vpop.f32.mrf.mxu0
      %v2712 = vadd.f32 %v2261, %v2711
      %v2713 = vpop.f32.mrf.mxu0
      %2714 = vmatprep.mubr.f32.mxu0 0.0
      %2715 = vmatmul.mubr.f32.gmra.mxu0 %v2381
      %v2716 = vpop.f32.mrf.mxu0
      %v2717 = vadd.f32 %v2261, %v2716
      %v2718 = vpop.f32.mrf.mxu0
      %2719 = vmatprep.mubr.f32.mxu0 0.0
      %2720 = vmatmul.mubr.f32.gmra.mxu0 %v2384
      %v2721 = vpop.f32.mrf.mxu0
      %v2722 = vadd.f32 %v2261, %v2721
      %v2723 = vpop.f32.mrf.mxu0
      %2724 = vmatprep.mubr.f32.mxu0 0.0
      %2725 = vmatmul.mubr.f32.gmra.mxu0 %v2387
      %v2726 = vpop.f32.mrf.mxu0
      %v2727 = vadd.f32 %v2261, %v2726
      %v2728 = vpop.f32.mrf.mxu0
      %2729 = vmatprep.mubr.f32.mxu0 0.0
      %2730 = vmatmul.mubr.f32.gmra.mxu0 %v2390
      %v2731 = vpop.f32.mrf.mxu0
      %v2732 = vadd.f32 %v2261, %v2731
      %v2733 = vpop.f32.mrf.mxu0
      %2734 = vmatprep.mubr.f32.mxu0 0.0
      %2735 = vmatmul.mubr.f32.gmra.mxu0 %v2393
      %v2736 = vpop.f32.mrf.mxu0
      %v2737 = vadd.f32 %v2261, %v2736
      %v2738 = vpop.f32.mrf.mxu0
      %2739 = vmatprep.mubr.f32.mxu0 0.0
      %2740 = vmatmul.mubr.f32.gmra.mxu0 %v2396
      %v2741 = vpop.f32.mrf.mxu0
      %v2742 = vadd.f32 %v2261, %v2741
      %v2743 = vpop.f32.mrf.mxu0
      %2744 = vmatprep.mubr.f32.mxu0 0.0
      %2745 = vmatmul.mubr.f32.gmra.mxu0 %v2399
      %v2746 = vpop.f32.mrf.mxu0
      %v2747 = vadd.f32 %v2261, %v2746
      %v2748 = vpop.f32.mrf.mxu0
      %2749 = vmatprep.mubr.f32.mxu0 0.0
      %2750 = vmatmul.mubr.f32.gmra.mxu0 %v2402
      %v2751 = vpop.f32.mrf.mxu0
      %v2752 = vadd.f32 %v2261, %v2751
      %v2753 = vpop.f32.mrf.mxu0
      %2754 = vmatprep.mubr.f32.mxu0 0.0
      %2755 = vmatmul.mubr.f32.gmra.mxu0 %v2405
      %v2756 = vpop.f32.mrf.mxu0
      %v2757 = vadd.f32 %v2261, %v2756
      %v2758 = vpop.f32.mrf.mxu0
      %2759 = vmatprep.mubr.f32.mxu0 0.0
      %2760 = vmatmul.mubr.f32.gmra.mxu0 %v2408
      %v2761 = vpop.f32.mrf.mxu0
      %v2762 = vadd.f32 %v2261, %v2761
      %v2763 = vpop.f32.mrf.mxu0
      %2764 = vmatprep.mubr.f32.mxu0 0.0
      %2765 = vmatmul.mubr.f32.gmra.mxu0 %v2411
      %v2766 = vpop.f32.mrf.mxu0
      %v2767 = vadd.f32 %v2261, %v2766
      %v2768 = vpop.f32.mrf.mxu0
      %2769 = vmatprep.mubr.f32.mxu0 0.0
      %2770 = vmatmul.mubr.f32.gmra.mxu0 %v2414
      %v2771 = vpop.f32.mrf.mxu0
      %v2772 = vadd.f32 %v2261, %v2771
      %v2773 = vpop.f32.mrf.mxu0
      %2774 = vmatprep.mubr.f32.mxu0 0.0
      %2775 = vmatmul.mubr.f32.gmra.mxu0 %v2417
      %v2776 = vpop.f32.mrf.mxu0
      %v2777 = vadd.f32 %v2261, %v2776
      %v2778 = vpop.f32.mrf.mxu0
      %2779 = vmatprep.mubr.f32.mxu0 0.0
      %2780 = vmatmul.mubr.f32.gmra.mxu0 %v2420
      %v2781 = vpop.f32.mrf.mxu0
      %v2782 = vadd.f32 %v2261, %v2781
      %v2783 = vpop.f32.mrf.mxu0
      %2784 = vmatprep.mubr.f32.mxu0 0.0
      %2785 = vmatmul.mubr.f32.gmra.mxu0 %v2423
      %v2786 = vpop.f32.mrf.mxu0
      %v2787 = vadd.f32 %v2261, %v2786
      %v2788 = vpop.f32.mrf.mxu0
      %2789 = vmatprep.mubr.f32.mxu0 0.0
      %2790 = vmatmul.mubr.f32.gmra.mxu0 %v2426
      %v2791 = vpop.f32.mrf.mxu0
      %v2792 = vadd.f32 %v2261, %v2791
      %v2793 = vpop.f32.mrf.mxu0
      %2794 = vmatprep.mubr.f32.mxu0 0.0
      %2795 = vmatmul.mubr.f32.gmra.mxu0 %v2429
      %v2796 = vpop.f32.mrf.mxu0
      %v2797 = vadd.f32 %v2261, %v2796
      %v2798 = vpop.f32.mrf.mxu0
      %2799 = vmatprep.mubr.f32.mxu0 0.0
      %2800 = vmatmul.mubr.f32.gmra.mxu0 %v2432
      %v2801 = vpop.f32.mrf.mxu0
      %v2802 = vadd.f32 %v2261, %v2801
      %v2803 = vpop.f32.mrf.mxu0
      %2804 = vmatprep.mubr.f32.mxu0 0.0
      %2805 = vmatmul.mubr.f32.gmra.mxu0 %v2435
      %v2806 = vpop.f32.mrf.mxu0
      %v2807 = vadd.f32 %v2261, %v2806
      %v2808 = vpop.f32.mrf.mxu0
      %2809 = vmatprep.mubr.f32.mxu0 0.0
      %2810 = vmatmul.mubr.f32.gmra.mxu0 %v2438
      %v2811 = vpop.f32.mrf.mxu0
      %v2812 = vadd.f32 %v2261, %v2811
      %v2813 = vpop.f32.mrf.mxu0
      %2814 = vmatprep.mubr.f32.mxu0 0.0
      %2815 = vmatmul.mubr.f32.gmra.mxu0 %v2441
      %v2816 = vpop.f32.mrf.mxu0
      %v2817 = vadd.f32 %v2261, %v2816
      %v2818 = vpop.f32.mrf.mxu0
      %2819 = vmatprep.mubr.f32.mxu0 0.0
      %2820 = vmatmul.mubr.f32.gmra.mxu0 %v2444
      %v2821 = vpop.f32.mrf.mxu0
      %v2822 = vadd.f32 %v2261, %v2821
      %v2823 = vpop.f32.mrf.mxu0
      %2824 = vmatprep.mubr.f32.mxu0 0.0
      %2825 = vmatmul.mubr.f32.gmra.mxu0 %v2447
      %v2826 = vpop.f32.mrf.mxu0
      %v2827 = vadd.f32 %v2261, %v2826
      %v2828 = vpop.f32.mrf.mxu0
      %2829 = vmatprep.mubr.f32.mxu0 0.0
      %2830 = vmatmul.mubr.f32.gmra.mxu0 %v2450
      %v2831 = vpop.f32.mrf.mxu0
      %v2832 = vadd.f32 %v2261, %v2831
      %v2833 = vpop.f32.mrf.mxu0
      %2834 = vmatprep.mubr.f32.mxu0 0.0
      %2835 = vmatmul.mubr.f32.gmra.mxu0 %v2453
      %v2836 = vpop.f32.mrf.mxu0
      %v2837 = vadd.f32 %v2261, %v2836
      %v2838 = vpop.f32.mrf.mxu0
      %2839 = vdwg.mxu0
      %vm2840 = vcmask 261120
      %2841 = vst.msk [vmem:[%s356] sm:$0xff] %vm2840, %v2522
      %2842 = vst.msk [vmem:[%s356 + $0x8] sm:$0xff] %vm2840, %v2527
      %2843 = vst.msk [vmem:[%s356 + $0x10] sm:$0xff] %vm2840, %v2532
      %2844 = vst.msk [vmem:[%s356 + $0x18] sm:$0xff] %vm2840, %v2537
      %2845 = vst.msk [vmem:[%s356 + $0x20] sm:$0xff] %vm2840, %v2542
      %2846 = vst.msk [vmem:[%s356 + $0x28] sm:$0xff] %vm2840, %v2547
      %2847 = vst.msk [vmem:[%s356 + $0x30] sm:$0xff] %vm2840, %v2552
      %2848 = vst.msk [vmem:[%s356 + $0x38] sm:$0xff] %vm2840, %v2557
      %2849 = vst.msk [vmem:[%s356 + $0x40] sm:$0xff] %vm2840, %v2562
      %2850 = vst.msk [vmem:[%s356 + $0x48] sm:$0xff] %vm2840, %v2567
      %2851 = vst.msk [vmem:[%s356 + $0x50] sm:$0xff] %vm2840, %v2572
      %2852 = vst.msk [vmem:[%s356 + $0x58] sm:$0xff] %vm2840, %v2577
      %2853 = vst.msk [vmem:[%s356 + $0x60] sm:$0xff] %vm2840, %v2582
      %2854 = vst.msk [vmem:[%s356 + $0x68] sm:$0xff] %vm2840, %v2587
      %2855 = vst.msk [vmem:[%s356 + $0x70] sm:$0xff] %vm2840, %v2592
      %2856 = vst.msk [vmem:[%s356 + $0x78] sm:$0xff] %vm2840, %v2597
      %2857 = vst.msk [vmem:[%s356 + $0x80] sm:$0xff] %vm2840, %v2602
      %2858 = vst.msk [vmem:[%s356 + $0x88] sm:$0xff] %vm2840, %v2607
      %2859 = vst.msk [vmem:[%s356 + $0x90] sm:$0xff] %vm2840, %v2612
      %2860 = vst.msk [vmem:[%s356 + $0x98] sm:$0xff] %vm2840, %v2617
      %2861 = vst.msk [vmem:[%s356 + $0xa0] sm:$0xff] %vm2840, %v2622
      %2862 = vst.msk [vmem:[%s356 + $0xa8] sm:$0xff] %vm2840, %v2627
      %2863 = vst.msk [vmem:[%s356 + $0xb0] sm:$0xff] %vm2840, %v2632
      %2864 = vst.msk [vmem:[%s356 + $0xb8] sm:$0xff] %vm2840, %v2637
      %2865 = vst.msk [vmem:[%s356 + $0xc0] sm:$0xff] %vm2840, %v2642
      %2866 = vst.msk [vmem:[%s356 + $0xc8] sm:$0xff] %vm2840, %v2647
      %2867 = vst.msk [vmem:[%s356 + $0xd0] sm:$0xff] %vm2840, %v2652
      %2868 = vst.msk [vmem:[%s356 + $0xd8] sm:$0xff] %vm2840, %v2657
      %2869 = vst.msk [vmem:[%s356 + $0xe0] sm:$0xff] %vm2840, %v2662
      %2870 = vst.msk [vmem:[%s356 + $0xe8] sm:$0xff] %vm2840, %v2667
      %2871 = vst.msk [vmem:[%s356 + $0xf0] sm:$0xff] %vm2840, %v2672
      %2872 = vst.msk [vmem:[%s356 + $0xf8] sm:$0xff] %vm2840, %v2677
      %2873 = vst.msk [vmem:[%s356 + $0x100] sm:$0xff] %vm2840, %v2682
      %2874 = vst.msk [vmem:[%s356 + $0x108] sm:$0xff] %vm2840, %v2687
      %2875 = vst.msk [vmem:[%s356 + $0x110] sm:$0xff] %vm2840, %v2692
      %2876 = vst.msk [vmem:[%s356 + $0x118] sm:$0xff] %vm2840, %v2697
      %2877 = vst.msk [vmem:[%s356 + $0x120] sm:$0xff] %vm2840, %v2702
      %2878 = vst.msk [vmem:[%s356 + $0x128] sm:$0xff] %vm2840, %v2707
      %2879 = vst.msk [vmem:[%s356 + $0x130] sm:$0xff] %vm2840, %v2712
      %2880 = vst.msk [vmem:[%s356 + $0x138] sm:$0xff] %vm2840, %v2717
      %2881 = vst.msk [vmem:[%s356 + $0x140] sm:$0xff] %vm2840, %v2722
      %2882 = vst.msk [vmem:[%s356 + $0x148] sm:$0xff] %vm2840, %v2727
      %2883 = vst.msk [vmem:[%s356 + $0x150] sm:$0xff] %vm2840, %v2732
      %2884 = vst.msk [vmem:[%s356 + $0x158] sm:$0xff] %vm2840, %v2737
      %2885 = vst.msk [vmem:[%s356 + $0x160] sm:$0xff] %vm2840, %v2742
      %2886 = vst.msk [vmem:[%s356 + $0x168] sm:$0xff] %vm2840, %v2747
      %2887 = vst.msk [vmem:[%s356 + $0x170] sm:$0xff] %vm2840, %v2752
      %2888 = vst.msk [vmem:[%s356 + $0x178] sm:$0xff] %vm2840, %v2757
      %2889 = vst.msk [vmem:[%s356 + $0x180] sm:$0xff] %vm2840, %v2762
      %2890 = vst.msk [vmem:[%s356 + $0x188] sm:$0xff] %vm2840, %v2767
      %2891 = vst.msk [vmem:[%s356 + $0x190] sm:$0xff] %vm2840, %v2772
      %2892 = vst.msk [vmem:[%s356 + $0x198] sm:$0xff] %vm2840, %v2777
      %2893 = vst.msk [vmem:[%s356 + $0x1a0] sm:$0xff] %vm2840, %v2782
      %2894 = vst.msk [vmem:[%s356 + $0x1a8] sm:$0xff] %vm2840, %v2787
      %2895 = vst.msk [vmem:[%s356 + $0x1b0] sm:$0xff] %vm2840, %v2792
      %2896 = vst.msk [vmem:[%s356 + $0x1b8] sm:$0xff] %vm2840, %v2797
      %2897 = vst.msk [vmem:[%s356 + $0x1c0] sm:$0xff] %vm2840, %v2802
      %2898 = vst.msk [vmem:[%s356 + $0x1c8] sm:$0xff] %vm2840, %v2807
      %2899 = vst.msk [vmem:[%s356 + $0x1d0] sm:$0xff] %vm2840, %v2812
      %2900 = vst.msk [vmem:[%s356 + $0x1d8] sm:$0xff] %vm2840, %v2817
      %2901 = vst.msk [vmem:[%s356 + $0x1e0] sm:$0xff] %vm2840, %v2822
      %2902 = vst.msk [vmem:[%s356 + $0x1e8] sm:$0xff] %vm2840, %v2827
      %2903 = vst.msk [vmem:[%s356 + $0x1f0] sm:$0xff] %vm2840, %v2832
      %2904 = vst.msk [vmem:[%s356 + $0x1f8] sm:$0xff] %vm2840, %v2837
      %s2905 = smul.u32 64, %s20
      %p2906 = scmp.lt.s32.totalorder %s2905, 127
      %s2907 = scalar_select %p2906, %s2905, 127
      %s2908 = smul.addr %s2907, 8
      %s2909 = scalar_lea.vmem %s9, %s2908
      // Predicated region
      $region57: #{tpu_custom_call.1} parent=55 // pred_check
        %p2910 = pneg %p237
      $region58: #{tpu_custom_call.1} parent=55 // pred_check_branch
        %2912 = sbr.rel (%p2910) target = $region60
      $region59: #{tpu_custom_call.1} parent=55 // pred_region
        %s2913 = smul.u32 64, %s20
      $region60: #{tpu_custom_call.1} parent=55 // pred_fallthru
        _
    $region56: #{tpu_custom_call.1} parent=5 // pred_fallthru
      _
    %p2914 = scmp.le.s32.totalorder 2, %s15
    // Predicated region
    $region61: #{tpu_custom_call.1} parent=5 // pred_check
      %p2915 = pneg %p2914
    $region62: #{tpu_custom_call.1} parent=5 // pred_check_branch
      %2917 = sbr.rel (%p2915) target = $region64
    $region63: #{tpu_custom_call.1} parent=5 // pred_region
      %s2918 = ssub.s32 %s15, 2
      // Predicated region
      $region65: #{tpu_custom_call.1} parent=63 // pred_check
        %p2919 = pneg %p243
      $region66: #{tpu_custom_call.1} parent=63 // pred_check_branch
        %2921 = sbr.rel (%p2919) target = $region68
      $region67: #{tpu_custom_call.1} parent=63 // pred_region
        %s2922 = smul.u32 64, %s21
        %p2923 = scmp.lt.s32.totalorder %s2922, 127
        %s2924 = scalar_select %p2923, %s2922, 127
        %s2925 = smul.addr %s2924, 8
        %s2926 = scalar_lea.vmem %s9, %s2925
      $region68: #{tpu_custom_call.1} parent=63 // pred_fallthru
        _
    $region64: #{tpu_custom_call.1} parent=5 // pred_fallthru
      _
  $region6: #{tpu_custom_call.1} parent=0 // loop_footer
    %s19 = sadd.s32 1, %s15
  $region7: #{tpu_custom_call.1} parent=0 // loop_footer_branch
    %14 = sbr.rel target = $region3
  $region8: #{tpu_custom_call.1} parent=0 // loop_exit
    _

</llo_original>
